<compile_context>
chip_gen: v7x
topology: tpu7x:2x2x1
jax: 0.10.0
libtpu: 0.0.40
codegen_flags: <defaults>
</compile_context>

<pallas_src>
import functools

import jax
import jax.numpy as jnp
from jax.experimental import pallas as pl
from jax.experimental.pallas import tpu as pltpu


def decoder_kernel(x_ref, hc0_ref, cc0_ref, wx_ref, wc_ref, b_ref, wrec_ref,
                   wd_ref, bd_ref, wd2_ref, bd2_ref,
                   out_ref, xg_ref, ht_ref, *, L, H, T, B, mean_win):
    f32 = jnp.float32
    LH = L * H
    G = 4 * LH

    # ---- one-time, batched input-side work (off the serial recurrence) -----
    # ReLU([x_t, ctx]) @ W_ih0 == ReLU(x_t) @ Wx + ReLU(ctx) @ Wc.  The gate
    # columns are pre-permuted into the fused [i|f|g|o] x [layer] layout and
    # the layer>0 slots of Wx/Wc are zero (those slots only carry biases), so
    # this single matmul + add produces every per-step additive gate term.
    ctx = jnp.maximum(cc0_ref[:, (L - 1) * H:L * H], 0.0)             # (B, H)
    const_add = (jnp.dot(ctx, wc_ref[...], preferred_element_type=f32)
                 + b_ref[...])                                        # (B, G)
    x_proj = jnp.dot(jnp.maximum(x_ref[...], 0.0), wx_ref[...],
                     preferred_element_type=f32)                      # (T*B, G)
    xg_ref[...] = x_proj.reshape(T, B, G) + const_add[None, :, :]

    wrec = wrec_ref[...]                                              # (LH, G)
    hcat = hc0_ref[...]                                               # (B, LH)
    ccat = cc0_ref[...]                                               # (B, LH)
    lane = jax.lax.broadcasted_iota(jnp.int32, (B, LH), 1)

    first_keep = T - mean_win

    def cell(gates, c_prev):
        # PyTorch gate order i, f, g, o; layers packed inside each gate group.
        s_if = jax.nn.sigmoid(gates[:, 0:2 * LH])
        i_a = s_if[:, 0:LH]
        f_a = s_if[:, LH:2 * LH]
        g_a = jnp.tanh(gates[:, 2 * LH:3 * LH])
        o_a = jax.nn.sigmoid(gates[:, 3 * LH:4 * LH])
        c_new = f_a * c_prev + i_a * g_a
        h_new = o_a * jnp.tanh(c_new)
        return h_new, c_new

    # ---- wavefront recurrence: layer l processes timestep s - l -------------
    # One fused MXU matmul per super-step; all layers read the pre-update
    # state, so they are data-independent within a step.
    for s in range(T + L - 1):                                        # static unroll
        t0 = min(s, T - 1)
        gates = (jnp.dot(hcat, wrec, preferred_element_type=f32)
                 + xg_ref[t0])                                        # (B, G)
        h_new, c_new = cell(gates, ccat)

        lo = max(0, s - (T - 1))      # lowest active layer this super-step
        hi = min(s, L - 1)            # highest active layer this super-step
        if lo == 0 and hi == L - 1:   # steady state: all layers advance
            ccat, hcat = c_new, h_new
        else:                         # pipeline fill / drain: mask idle layers
            m = (lane >= lo * H) & (lane < (hi + 1) * H)
            ccat = jnp.where(m, c_new, ccat)
            hcat = jnp.where(m, h_new, hcat)

        t_top = s - (L - 1)           # timestep the top layer just finished
        if t_top >= first_keep:
            k = t_top - first_keep
            ht_ref[pl.ds(k * B, B), :] = hcat

    # ---- batched output head over the last mean_win timesteps ---------------
    hts = ht_ref[...]                                                 # (mw*B, LH)
    d = jnp.maximum(jnp.dot(hts, wd_ref[...], preferred_element_type=f32)
                    + bd_ref[...], 0.0)                               # (mw*B, in)
    ssum = jnp.sum(d.reshape(mean_win, B, d.shape[-1]), axis=0)       # (B, in)
    # 1/mean_win is folded into wd2 at pack time.
    logits = (jnp.dot(ssum, wd2_ref[...], preferred_element_type=f32)
              + bd2_ref[...])                                         # (B, 4)
    mx = jnp.max(logits, axis=-1, keepdims=True)
    e = jnp.exp(logits - mx)
    out_ref[...] = e / jnp.sum(e, axis=-1, keepdims=True)


@jax.jit
def decoder_forward(X, h0, c0, packed):
    """X: (B, T, input_dim); h0, c0: (L, B, H). Returns (B, 4) softmax probs."""
    B, T, input_dim = X.shape
    L, _, H = h0.shape
    mean_win = min(10, T)
    B_pad = max(8, ((B + 7) // 8) * 8)       # full sublane occupancy
    wx, wc, b8, wrec, wd_ext, bd, wd2_s, bd2 = packed

    # Layout plumbing only (zero padding + transpose/reshape); no compute is
    # hoisted out of the kernel.
    Xp = jnp.zeros((B_pad, T, input_dim), X.dtype).at[:B].set(X)
    h0p = jnp.zeros((L, B_pad, H), h0.dtype).at[:, :B].set(h0)
    c0p = jnp.zeros((L, B_pad, H), c0.dtype).at[:, :B].set(c0)
    x2d = jnp.transpose(Xp, (1, 0, 2)).reshape(T * B_pad, input_dim)  # time-major
    hcat0 = jnp.transpose(h0p, (1, 0, 2)).reshape(B_pad, L * H)       # [h0|h1|..]
    ccat0 = jnp.transpose(c0p, (1, 0, 2)).reshape(B_pad, L * H)       # [c0|c1|..]

    kernel = functools.partial(decoder_kernel, L=L, H=H, T=T, B=B_pad,
                               mean_win=mean_win)
    vmem = pl.BlockSpec(memory_space=pltpu.MemorySpace.VMEM)

    # Grid-less pallas_call: everything (< 200 KiB) is VMEM-resident.
    out = pl.pallas_call(
        kernel,
        out_shape=jax.ShapeDtypeStruct((B_pad, 4), jnp.float32),
        in_specs=[vmem] * 11,
        out_specs=vmem,
        scratch_shapes=[
            pltpu.VMEM((T, B_pad, 4 * L * H), jnp.float32),      # gate pre-acts
            pltpu.VMEM((mean_win * B_pad, L * H), jnp.float32),  # top-layer h's
        ],
    )(x2d, hcat0, ccat0, wx, wc, b8, wrec, wd_ext, bd, wd2_s, bd2)
    return out[:B]


def make_torch_params(key, input_dim, H, L):
    """Deterministic synthetic parameters in PyTorch layouts."""
    D0 = input_dim + H
    u = lambda k, shp: jax.random.uniform(k, shp, jnp.float32, -0.1, 0.1)
    ks = iter(jax.random.split(key, 4 * L + 4))
    w_ih, w_hh, b_ih, b_hh = [], [], [], []
    for l in range(L):
        in_l = D0 if l == 0 else H
        w_ih.append(u(next(ks), (4 * H, in_l)))
        w_hh.append(u(next(ks), (4 * H, H)))
        b_ih.append(u(next(ks), (4 * H,)))
        b_hh.append(u(next(ks), (4 * H,)))
    wd = u(next(ks), (input_dim, H))    # dense:  (out, in)
    bd = u(next(ks), (input_dim,))
    wd2 = u(next(ks), (4, input_dim))   # dense2: (out, in)
    bd2 = u(next(ks), (4,))
    return (w_ih, w_hh, b_ih, b_hh, wd, bd, wd2, bd2)


def pack_params(tp, input_dim, H, L, T):
    """Repack PyTorch-style params into the fused / wavefront kernel layout.

    Column layout of the fused gate axis (width 4*L*H):
      [ i_0..i_{L-1} | f_0..f_{L-1} | g_0..g_{L-1} | o_0..o_{L-1} ], each H wide,
    matching the [h_0|h_1|...] / [c_0|c_1|...] lane layout of the fused state.
    """
    w_ih, w_hh, b_ih, b_hh, wd, bd, wd2, bd2 = tp
    mean_win = min(10, T)
    LH = L * H
    G = 4 * LH
    wrec = jnp.zeros((LH, G), jnp.float32)      # fused recurrent weight
    wx = jnp.zeros((input_dim, G), jnp.float32)  # x-side (layer-0 slots only)
    wc = jnp.zeros((H, G), jnp.float32)          # ctx-side (layer-0 slots only)
    b8 = jnp.zeros((1, G), jnp.float32)          # all layers' summed biases
    for l in range(L):
        wih_t = w_ih[l].T                        # (in_l, 4H), cols [i f g o]
        whh_t = w_hh[l].T                        # (H, 4H)
        bsum = b_ih[l] + b_hh[l]
        for q in range(4):                       # PyTorch gate order i, f, g, o
            col = q * LH + l * H
            src = slice(q * H, (q + 1) * H)
            if l == 0:
                wx = wx.at[:, col:col + H].set(wih_t[:input_dim, src])
                wc = wc.at[:, col:col + H].set(wih_t[input_dim:, src])
            else:
                wrec = wrec.at[(l - 1) * H:l * H, col:col + H].set(wih_t[:, src])
            wrec = wrec.at[l * H:(l + 1) * H, col:col + H].set(whh_t[:, src])
            b8 = b8.at[0, col:col + H].set(bsum[src])
    # Head: zero-pad dense so the fused (B, L*H) state can be used directly
    # (non-top layers contribute exactly zero); fold 1/mean_win into dense2.
    wd_ext = jnp.zeros((LH, input_dim), jnp.float32).at[(L - 1) * H:, :].set(wd.T)
    wd2_s = wd2.T * (1.0 / mean_win)
    return (wx, wc, b8, wrec, wd_ext, bd[None, :], wd2_s, bd2[None, :])


def decoder_ref(X, h0, c0, tp):
    """Pure-JAX reference with PyTorch-style weights (inference, no dropout)."""
    w_ih, w_hh, b_ih, b_hh, wd, bd, wd2, bd2 = tp
    B, T, input_dim = X.shape
    L, _, H = h0.shape
    context = jnp.broadcast_to(c0[-1][:, None, :], (B, T, H))
    xc = jnp.maximum(jnp.concatenate([X, context], axis=-1), 0.0)
    h = [h0[l] for l in range(L)]
    c = [c0[l] for l in range(L)]
    outs = []
    for t in range(T):
        inp = xc[:, t, :]
        for l in range(L):
            gates = inp @ w_ih[l].T + h[l] @ w_hh[l].T + b_ih[l] + b_hh[l]
            i_g = jax.nn.sigmoid(gates[:, :H])
            f_g = jax.nn.sigmoid(gates[:, H:2 * H])
            g_g = jnp.tanh(gates[:, 2 * H:3 * H])
            o_g = jax.nn.sigmoid(gates[:, 3 * H:])
            c[l] = f_g * c[l] + i_g * g_g
            h[l] = o_g * jnp.tanh(c[l])
            inp = h[l]
        outs.append(inp)
    out = jnp.stack(outs, axis=1)                        # (B, T, H)
    d = jnp.maximum(out @ wd.T + bd, 0.0)                # (B, T, input_dim)
    mw = min(10, T)
    mean = jnp.mean(d[:, -mw:, :], axis=1)               # (B, input_dim)
    logits = mean @ wd2.T + bd2                          # (B, 4)
    return jax.nn.softmax(logits, axis=-1)


if __name__ == "__main__":
    B, T, input_dim, H, L = 2, 12, 8, 32, 2

    key = jax.random.PRNGKey(0)
    kx, kh, kc, kp = jax.random.split(key, 4)
    X = jax.random.normal(kx, (B, T, input_dim), jnp.float32)
    h0 = jax.random.normal(kh, (L, B, H), jnp.float32) * 0.5
    c0 = jax.random.normal(kc, (L, B, H), jnp.float32) * 0.5

    tp = make_torch_params(kp, input_dim, H, L)
    packed = pack_params(tp, input_dim, H, L, T)

    out = jax.block_until_ready(decoder_forward(X, h0, c0, packed))
    ref = decoder_ref(X, h0, c0, tp)

    assert out.shape == (B, 4)
    assert jnp.allclose(out, ref, atol=3e-5, rtol=3e-5), (out, ref)
    assert jnp.allclose(jnp.sum(out, axis=-1), 1.0, atol=1e-5)

    # TODO(synk): nn.LSTM dropout=0.1 is training-only; inference forward is
    # dropout-free, so it is intentionally omitted.
    print("KERNEL_OK")
</pallas_src>

<mosaic_0001>
module attributes {stable_mosaic.version = 11 : i64} {
  func.func @decoder_kernel(%arg0: memref<96x8xf32, #tpu.memory_space<vmem>>, %arg1: memref<8x64xf32, #tpu.memory_space<vmem>>, %arg2: memref<8x64xf32, #tpu.memory_space<vmem>>, %arg3: memref<8x256xf32, #tpu.memory_space<vmem>>, %arg4: memref<32x256xf32, #tpu.memory_space<vmem>>, %arg5: memref<1x256xf32, #tpu.memory_space<vmem>>, %arg6: memref<64x256xf32, #tpu.memory_space<vmem>>, %arg7: memref<64x8xf32, #tpu.memory_space<vmem>>, %arg8: memref<1x8xf32, #tpu.memory_space<vmem>>, %arg9: memref<8x4xf32, #tpu.memory_space<vmem>>, %arg10: memref<1x4xf32, #tpu.memory_space<vmem>>, %arg11: memref<8x4xf32, #tpu.memory_space<vmem>>, %arg12: memref<12x8x256xf32, #tpu.memory_space<vmem>>, %arg13: memref<80x64xf32, #tpu.memory_space<vmem>>) attributes {dimension_semantics = [], scalar_prefetch = 0 : i64, scratch_operands = 2 : i64, tpu.core_type = #tpu.core_type<tc>} {
    %c0 = arith.constant 0 : index
    %c32 = arith.constant 32 : index
    %0 = vector.load %arg2[%c0, %c32] : memref<8x64xf32, #tpu.memory_space<vmem>>, vector<8x32xf32>
    %cst = arith.constant 0.000000e+00 : f32
    %1 = vector.broadcast %cst : f32 to vector<8x32xf32>
    %2 = arith.maximumf %0, %1 : vector<8x32xf32>
    %c0_0 = arith.constant 0 : index
    %c0_1 = arith.constant 0 : index
    %3 = vector.load %arg4[%c0_0, %c0_1] : memref<32x256xf32, #tpu.memory_space<vmem>>, vector<32x256xf32>
    %cst_2 = arith.constant dense<0.000000e+00> : vector<8x256xf32>
    %4 = tpu.matmul %2, %3, %cst_2 {dimension_numbers = #tpu.dot_dimension_numbers<[1], [0], [0], [1], [0, 0, 1, 1], [], []>} : vector<8x32xf32>, vector<32x256xf32>, vector<8x256xf32> -> vector<8x256xf32>
    %c0_3 = arith.constant 0 : index
    %c0_4 = arith.constant 0 : index
    %5 = vector.load %arg5[%c0_3, %c0_4] : memref<1x256xf32, #tpu.memory_space<vmem>>, vector<1x256xf32>
    %6 = vector.broadcast %5 : vector<1x256xf32> to vector<8x256xf32>
    %7 = arith.addf %4, %6 : vector<8x256xf32>
    %c0_5 = arith.constant 0 : index
    %c0_6 = arith.constant 0 : index
    %8 = vector.load %arg0[%c0_5, %c0_6] : memref<96x8xf32, #tpu.memory_space<vmem>>, vector<96x8xf32>
    %cst_7 = arith.constant 0.000000e+00 : f32
    %9 = vector.broadcast %cst_7 : f32 to vector<96x8xf32>
    %10 = arith.maximumf %8, %9 : vector<96x8xf32>
    %c0_8 = arith.constant 0 : index
    %c0_9 = arith.constant 0 : index
    %11 = vector.load %arg3[%c0_8, %c0_9] : memref<8x256xf32, #tpu.memory_space<vmem>>, vector<8x256xf32>
    %cst_10 = arith.constant dense<0.000000e+00> : vector<96x256xf32>
    %12 = tpu.matmul %10, %11, %cst_10 {dimension_numbers = #tpu.dot_dimension_numbers<[1], [0], [0], [1], [0, 0, 1, 1], [], []>} : vector<96x8xf32>, vector<8x256xf32>, vector<96x256xf32> -> vector<96x256xf32>
    %13 = vector.shape_cast %12 : vector<96x256xf32> to vector<12x8x256xf32>
    %14 = vector.shape_cast %7 : vector<8x256xf32> to vector<1x8x256xf32>
    %15 = vector.broadcast %14 : vector<1x8x256xf32> to vector<12x8x256xf32>
    %16 = arith.addf %13, %15 : vector<12x8x256xf32>
    %c0_11 = arith.constant 0 : index
    %c0_12 = arith.constant 0 : index
    %c0_13 = arith.constant 0 : index
    %17 = vector.load %arg12[%c0_11, %c0_12, %c0_13] : memref<12x8x256xf32, #tpu.memory_space<vmem>>, vector<12x8x256xf32>
    tpu.vector_store %arg12[%c0_11, %c0_12, %c0_13], %16 {strides = array<i32>} : memref<12x8x256xf32, #tpu.memory_space<vmem>>, vector<12x8x256xf32>,
    %c0_14 = arith.constant 0 : index
    %c0_15 = arith.constant 0 : index
    %18 = vector.load %arg6[%c0_14, %c0_15] : memref<64x256xf32, #tpu.memory_space<vmem>>, vector<64x256xf32>
    %c0_16 = arith.constant 0 : index
    %c0_17 = arith.constant 0 : index
    %19 = vector.load %arg1[%c0_16, %c0_17] : memref<8x64xf32, #tpu.memory_space<vmem>>, vector<8x64xf32>
    %c0_18 = arith.constant 0 : index
    %c0_19 = arith.constant 0 : index
    %20 = vector.load %arg2[%c0_18, %c0_19] : memref<8x64xf32, #tpu.memory_space<vmem>>, vector<8x64xf32>
    %21 = tpu.iota {dimensions = array<i32: 1>} : vector<8x64xi32>
    %cst_20 = arith.constant dense<0.000000e+00> : vector<8x256xf32>
    %22 = tpu.matmul %19, %18, %cst_20 {dimension_numbers = #tpu.dot_dimension_numbers<[1], [0], [0], [1], [0, 0, 1, 1], [], []>} : vector<8x64xf32>, vector<64x256xf32>, vector<8x256xf32> -> vector<8x256xf32>
    %c0_21 = arith.constant 0 : index
    %c0_22 = arith.constant 0 : index
    %c0_23 = arith.constant 0 : index
    %23 = vector.load %arg12[%c0_21, %c0_22, %c0_23] : memref<12x8x256xf32, #tpu.memory_space<vmem>>, vector<1x8x256xf32>
    %24 = vector.shape_cast %23 : vector<1x8x256xf32> to vector<8x256xf32>
    %25 = arith.addf %22, %24 : vector<8x256xf32>
    %26 = vector.extract_strided_slice %25 {offsets = [0, 0], sizes = [8, 128], strides = [1, 1]} : vector<8x256xf32> to vector<8x128xf32>
    %27 = arith.negf %26 : vector<8x128xf32>
    %28 = math.exp %27 : vector<8x128xf32>
    %cst_24 = arith.constant 1.000000e+00 : f32
    %29 = vector.broadcast %cst_24 : f32 to vector<8x128xf32>
    %30 = arith.addf %29, %28 : vector<8x128xf32>
    %31 = arith.divf %29, %30 : vector<8x128xf32>
    %32 = vector.extract_strided_slice %31 {offsets = [0, 0], sizes = [8, 64], strides = [1, 1]} : vector<8x128xf32> to vector<8x64xf32>
    %33 = vector.extract_strided_slice %31 {offsets = [0, 64], sizes = [8, 64], strides = [1, 1]} : vector<8x128xf32> to vector<8x64xf32>
    %34 = vector.extract_strided_slice %25 {offsets = [0, 128], sizes = [8, 64], strides = [1, 1]} : vector<8x256xf32> to vector<8x64xf32>
    %35 = math.tanh %34 : vector<8x64xf32>
    %36 = vector.extract_strided_slice %25 {offsets = [0, 192], sizes = [8, 64], strides = [1, 1]} : vector<8x256xf32> to vector<8x64xf32>
    %37 = arith.negf %36 : vector<8x64xf32>
    %38 = math.exp %37 : vector<8x64xf32>
    %cst_25 = arith.constant 1.000000e+00 : f32
    %39 = vector.broadcast %cst_25 : f32 to vector<8x64xf32>
    %40 = arith.addf %39, %38 : vector<8x64xf32>
    %41 = arith.divf %39, %40 : vector<8x64xf32>
    %42 = arith.mulf %33, %20 : vector<8x64xf32>
    %43 = arith.mulf %32, %35 : vector<8x64xf32>
    %44 = arith.addf %42, %43 : vector<8x64xf32>
    %45 = math.tanh %44 : vector<8x64xf32>
    %46 = arith.mulf %41, %45 : vector<8x64xf32>
    %c0_i32 = arith.constant 0 : i32
    %47 = vector.broadcast %c0_i32 : i32 to vector<8x64xi32>
    %48 = arith.cmpi sge, %21, %47 : vector<8x64xi32>
    %c32_i32 = arith.constant 32 : i32
    %49 = vector.broadcast %c32_i32 : i32 to vector<8x64xi32>
    %50 = arith.cmpi slt, %21, %49 : vector<8x64xi32>
    %51 = arith.andi %48, %50 : vector<8x64xi1>
    %52 = arith.select %51, %44, %20 : vector<8x64xi1>, vector<8x64xf32>
    %53 = arith.select %51, %46, %19 : vector<8x64xi1>, vector<8x64xf32>
    %cst_26 = arith.constant dense<0.000000e+00> : vector<8x256xf32>
    %54 = tpu.matmul %53, %18, %cst_26 {dimension_numbers = #tpu.dot_dimension_numbers<[1], [0], [0], [1], [0, 0, 1, 1], [], []>} : vector<8x64xf32>, vector<64x256xf32>, vector<8x256xf32> -> vector<8x256xf32>
    %c1 = arith.constant 1 : index
    %c0_27 = arith.constant 0 : index
    %c0_28 = arith.constant 0 : index
    %55 = vector.load %arg12[%c1, %c0_27, %c0_28] : memref<12x8x256xf32, #tpu.memory_space<vmem>>, vector<1x8x256xf32>
    %56 = vector.shape_cast %55 : vector<1x8x256xf32> to vector<8x256xf32>
    %57 = arith.addf %54, %56 : vector<8x256xf32>
    %58 = vector.extract_strided_slice %57 {offsets = [0, 0], sizes = [8, 128], strides = [1, 1]} : vector<8x256xf32> to vector<8x128xf32>
    %59 = arith.negf %58 : vector<8x128xf32>
    %60 = math.exp %59 : vector<8x128xf32>
    %cst_29 = arith.constant 1.000000e+00 : f32
    %61 = vector.broadcast %cst_29 : f32 to vector<8x128xf32>
    %62 = arith.addf %61, %60 : vector<8x128xf32>
    %63 = arith.divf %61, %62 : vector<8x128xf32>
    %64 = vector.extract_strided_slice %63 {offsets = [0, 0], sizes = [8, 64], strides = [1, 1]} : vector<8x128xf32> to vector<8x64xf32>
    %65 = vector.extract_strided_slice %63 {offsets = [0, 64], sizes = [8, 64], strides = [1, 1]} : vector<8x128xf32> to vector<8x64xf32>
    %66 = vector.extract_strided_slice %57 {offsets = [0, 128], sizes = [8, 64], strides = [1, 1]} : vector<8x256xf32> to vector<8x64xf32>
    %67 = math.tanh %66 : vector<8x64xf32>
    %68 = vector.extract_strided_slice %57 {offsets = [0, 192], sizes = [8, 64], strides = [1, 1]} : vector<8x256xf32> to vector<8x64xf32>
    %69 = arith.negf %68 : vector<8x64xf32>
    %70 = math.exp %69 : vector<8x64xf32>
    %cst_30 = arith.constant 1.000000e+00 : f32
    %71 = vector.broadcast %cst_30 : f32 to vector<8x64xf32>
    %72 = arith.addf %71, %70 : vector<8x64xf32>
    %73 = arith.divf %71, %72 : vector<8x64xf32>
    %74 = arith.mulf %65, %52 : vector<8x64xf32>
    %75 = arith.mulf %64, %67 : vector<8x64xf32>
    %76 = arith.addf %74, %75 : vector<8x64xf32>
    %77 = math.tanh %76 : vector<8x64xf32>
    %78 = arith.mulf %73, %77 : vector<8x64xf32>
    %cst_31 = arith.constant dense<0.000000e+00> : vector<8x256xf32>
    %79 = tpu.matmul %78, %18, %cst_31 {dimension_numbers = #tpu.dot_dimension_numbers<[1], [0], [0], [1], [0, 0, 1, 1], [], []>} : vector<8x64xf32>, vector<64x256xf32>, vector<8x256xf32> -> vector<8x256xf32>
    %c2 = arith.constant 2 : index
    %c0_32 = arith.constant 0 : index
    %c0_33 = arith.constant 0 : index
    %80 = vector.load %arg12[%c2, %c0_32, %c0_33] : memref<12x8x256xf32, #tpu.memory_space<vmem>>, vector<1x8x256xf32>
    %81 = vector.shape_cast %80 : vector<1x8x256xf32> to vector<8x256xf32>
    %82 = arith.addf %79, %81 : vector<8x256xf32>
    %83 = vector.extract_strided_slice %82 {offsets = [0, 0], sizes = [8, 128], strides = [1, 1]} : vector<8x256xf32> to vector<8x128xf32>
    %84 = arith.negf %83 : vector<8x128xf32>
    %85 = math.exp %84 : vector<8x128xf32>
    %cst_34 = arith.constant 1.000000e+00 : f32
    %86 = vector.broadcast %cst_34 : f32 to vector<8x128xf32>
    %87 = arith.addf %86, %85 : vector<8x128xf32>
    %88 = arith.divf %86, %87 : vector<8x128xf32>
    %89 = vector.extract_strided_slice %88 {offsets = [0, 0], sizes = [8, 64], strides = [1, 1]} : vector<8x128xf32> to vector<8x64xf32>
    %90 = vector.extract_strided_slice %88 {offsets = [0, 64], sizes = [8, 64], strides = [1, 1]} : vector<8x128xf32> to vector<8x64xf32>
    %91 = vector.extract_strided_slice %82 {offsets = [0, 128], sizes = [8, 64], strides = [1, 1]} : vector<8x256xf32> to vector<8x64xf32>
    %92 = math.tanh %91 : vector<8x64xf32>
    %93 = vector.extract_strided_slice %82 {offsets = [0, 192], sizes = [8, 64], strides = [1, 1]} : vector<8x256xf32> to vector<8x64xf32>
    %94 = arith.negf %93 : vector<8x64xf32>
    %95 = math.exp %94 : vector<8x64xf32>
    %cst_35 = arith.constant 1.000000e+00 : f32
    %96 = vector.broadcast %cst_35 : f32 to vector<8x64xf32>
    %97 = arith.addf %96, %95 : vector<8x64xf32>
    %98 = arith.divf %96, %97 : vector<8x64xf32>
    %99 = arith.mulf %90, %76 : vector<8x64xf32>
    %100 = arith.mulf %89, %92 : vector<8x64xf32>
    %101 = arith.addf %99, %100 : vector<8x64xf32>
    %102 = math.tanh %101 : vector<8x64xf32>
    %103 = arith.mulf %98, %102 : vector<8x64xf32>
    %cst_36 = arith.constant dense<0.000000e+00> : vector<8x256xf32>
    %104 = tpu.matmul %103, %18, %cst_36 {dimension_numbers = #tpu.dot_dimension_numbers<[1], [0], [0], [1], [0, 0, 1, 1], [], []>} : vector<8x64xf32>, vector<64x256xf32>, vector<8x256xf32> -> vector<8x256xf32>
    %c3 = arith.constant 3 : index
    %c0_37 = arith.constant 0 : index
    %c0_38 = arith.constant 0 : index
    %105 = vector.load %arg12[%c3, %c0_37, %c0_38] : memref<12x8x256xf32, #tpu.memory_space<vmem>>, vector<1x8x256xf32>
    %106 = vector.shape_cast %105 : vector<1x8x256xf32> to vector<8x256xf32>
    %107 = arith.addf %104, %106 : vector<8x256xf32>
    %108 = vector.extract_strided_slice %107 {offsets = [0, 0], sizes = [8, 128], strides = [1, 1]} : vector<8x256xf32> to vector<8x128xf32>
    %109 = arith.negf %108 : vector<8x128xf32>
    %110 = math.exp %109 : vector<8x128xf32>
    %cst_39 = arith.constant 1.000000e+00 : f32
    %111 = vector.broadcast %cst_39 : f32 to vector<8x128xf32>
    %112 = arith.addf %111, %110 : vector<8x128xf32>
    %113 = arith.divf %111, %112 : vector<8x128xf32>
    %114 = vector.extract_strided_slice %113 {offsets = [0, 0], sizes = [8, 64], strides = [1, 1]} : vector<8x128xf32> to vector<8x64xf32>
    %115 = vector.extract_strided_slice %113 {offsets = [0, 64], sizes = [8, 64], strides = [1, 1]} : vector<8x128xf32> to vector<8x64xf32>
    %116 = vector.extract_strided_slice %107 {offsets = [0, 128], sizes = [8, 64], strides = [1, 1]} : vector<8x256xf32> to vector<8x64xf32>
    %117 = math.tanh %116 : vector<8x64xf32>
    %118 = vector.extract_strided_slice %107 {offsets = [0, 192], sizes = [8, 64], strides = [1, 1]} : vector<8x256xf32> to vector<8x64xf32>
    %119 = arith.negf %118 : vector<8x64xf32>
    %120 = math.exp %119 : vector<8x64xf32>
    %cst_40 = arith.constant 1.000000e+00 : f32
    %121 = vector.broadcast %cst_40 : f32 to vector<8x64xf32>
    %122 = arith.addf %121, %120 : vector<8x64xf32>
    %123 = arith.divf %121, %122 : vector<8x64xf32>
    %124 = arith.mulf %115, %101 : vector<8x64xf32>
    %125 = arith.mulf %114, %117 : vector<8x64xf32>
    %126 = arith.addf %124, %125 : vector<8x64xf32>
    %127 = math.tanh %126 : vector<8x64xf32>
    %128 = arith.mulf %123, %127 : vector<8x64xf32>
    %c0_41 = arith.constant 0 : index
    %c0_42 = arith.constant 0 : index
    %129 = vector.load %arg13[%c0_41, %c0_42] : memref<80x64xf32, #tpu.memory_space<vmem>>, vector<8x64xf32>
    tpu.vector_store %arg13[%c0_41, %c0_42], %128 {strides = array<i32>} : memref<80x64xf32, #tpu.memory_space<vmem>>, vector<8x64xf32>,
    %cst_43 = arith.constant dense<0.000000e+00> : vector<8x256xf32>
    %130 = tpu.matmul %128, %18, %cst_43 {dimension_numbers = #tpu.dot_dimension_numbers<[1], [0], [0], [1], [0, 0, 1, 1], [], []>} : vector<8x64xf32>, vector<64x256xf32>, vector<8x256xf32> -> vector<8x256xf32>
    %c4 = arith.constant 4 : index
    %c0_44 = arith.constant 0 : index
    %c0_45 = arith.constant 0 : index
    %131 = vector.load %arg12[%c4, %c0_44, %c0_45] : memref<12x8x256xf32, #tpu.memory_space<vmem>>, vector<1x8x256xf32>
    %132 = vector.shape_cast %131 : vector<1x8x256xf32> to vector<8x256xf32>
    %133 = arith.addf %130, %132 : vector<8x256xf32>
    %134 = vector.extract_strided_slice %133 {offsets = [0, 0], sizes = [8, 128], strides = [1, 1]} : vector<8x256xf32> to vector<8x128xf32>
    %135 = arith.negf %134 : vector<8x128xf32>
    %136 = math.exp %135 : vector<8x128xf32>
    %cst_46 = arith.constant 1.000000e+00 : f32
    %137 = vector.broadcast %cst_46 : f32 to vector<8x128xf32>
    %138 = arith.addf %137, %136 : vector<8x128xf32>
    %139 = arith.divf %137, %138 : vector<8x128xf32>
    %140 = vector.extract_strided_slice %139 {offsets = [0, 0], sizes = [8, 64], strides = [1, 1]} : vector<8x128xf32> to vector<8x64xf32>
    %141 = vector.extract_strided_slice %139 {offsets = [0, 64], sizes = [8, 64], strides = [1, 1]} : vector<8x128xf32> to vector<8x64xf32>
    %142 = vector.extract_strided_slice %133 {offsets = [0, 128], sizes = [8, 64], strides = [1, 1]} : vector<8x256xf32> to vector<8x64xf32>
    %143 = math.tanh %142 : vector<8x64xf32>
    %144 = vector.extract_strided_slice %133 {offsets = [0, 192], sizes = [8, 64], strides = [1, 1]} : vector<8x256xf32> to vector<8x64xf32>
    %145 = arith.negf %144 : vector<8x64xf32>
    %146 = math.exp %145 : vector<8x64xf32>
    %cst_47 = arith.constant 1.000000e+00 : f32
    %147 = vector.broadcast %cst_47 : f32 to vector<8x64xf32>
    %148 = arith.addf %147, %146 : vector<8x64xf32>
    %149 = arith.divf %147, %148 : vector<8x64xf32>
    %150 = arith.mulf %141, %126 : vector<8x64xf32>
    %151 = arith.mulf %140, %143 : vector<8x64xf32>
    %152 = arith.addf %150, %151 : vector<8x64xf32>
    %153 = math.tanh %152 : vector<8x64xf32>
    %154 = arith.mulf %149, %153 : vector<8x64xf32>
    %c8 = arith.constant 8 : index
    %c0_48 = arith.constant 0 : index
    %155 = vector.load %arg13[%c8, %c0_48] : memref<80x64xf32, #tpu.memory_space<vmem>>, vector<8x64xf32>
    tpu.vector_store %arg13[%c8, %c0_48], %154 {strides = array<i32>} : memref<80x64xf32, #tpu.memory_space<vmem>>, vector<8x64xf32>,
    %cst_49 = arith.constant dense<0.000000e+00> : vector<8x256xf32>
    %156 = tpu.matmul %154, %18, %cst_49 {dimension_numbers = #tpu.dot_dimension_numbers<[1], [0], [0], [1], [0, 0, 1, 1], [], []>} : vector<8x64xf32>, vector<64x256xf32>, vector<8x256xf32> -> vector<8x256xf32>
    %c5 = arith.constant 5 : index
    %c0_50 = arith.constant 0 : index
    %c0_51 = arith.constant 0 : index
    %157 = vector.load %arg12[%c5, %c0_50, %c0_51] : memref<12x8x256xf32, #tpu.memory_space<vmem>>, vector<1x8x256xf32>
    %158 = vector.shape_cast %157 : vector<1x8x256xf32> to vector<8x256xf32>
    %159 = arith.addf %156, %158 : vector<8x256xf32>
    %160 = vector.extract_strided_slice %159 {offsets = [0, 0], sizes = [8, 128], strides = [1, 1]} : vector<8x256xf32> to vector<8x128xf32>
    %161 = arith.negf %160 : vector<8x128xf32>
    %162 = math.exp %161 : vector<8x128xf32>
    %cst_52 = arith.constant 1.000000e+00 : f32
    %163 = vector.broadcast %cst_52 : f32 to vector<8x128xf32>
    %164 = arith.addf %163, %162 : vector<8x128xf32>
    %165 = arith.divf %163, %164 : vector<8x128xf32>
    %166 = vector.extract_strided_slice %165 {offsets = [0, 0], sizes = [8, 64], strides = [1, 1]} : vector<8x128xf32> to vector<8x64xf32>
    %167 = vector.extract_strided_slice %165 {offsets = [0, 64], sizes = [8, 64], strides = [1, 1]} : vector<8x128xf32> to vector<8x64xf32>
    %168 = vector.extract_strided_slice %159 {offsets = [0, 128], sizes = [8, 64], strides = [1, 1]} : vector<8x256xf32> to vector<8x64xf32>
    %169 = math.tanh %168 : vector<8x64xf32>
    %170 = vector.extract_strided_slice %159 {offsets = [0, 192], sizes = [8, 64], strides = [1, 1]} : vector<8x256xf32> to vector<8x64xf32>
    %171 = arith.negf %170 : vector<8x64xf32>
    %172 = math.exp %171 : vector<8x64xf32>
    %cst_53 = arith.constant 1.000000e+00 : f32
    %173 = vector.broadcast %cst_53 : f32 to vector<8x64xf32>
    %174 = arith.addf %173, %172 : vector<8x64xf32>
    %175 = arith.divf %173, %174 : vector<8x64xf32>
    %176 = arith.mulf %167, %152 : vector<8x64xf32>
    %177 = arith.mulf %166, %169 : vector<8x64xf32>
    %178 = arith.addf %176, %177 : vector<8x64xf32>
    %179 = math.tanh %178 : vector<8x64xf32>
    %180 = arith.mulf %175, %179 : vector<8x64xf32>
    %c16 = arith.constant 16 : index
    %c0_54 = arith.constant 0 : index
    %181 = vector.load %arg13[%c16, %c0_54] : memref<80x64xf32, #tpu.memory_space<vmem>>, vector<8x64xf32>
    tpu.vector_store %arg13[%c16, %c0_54], %180 {strides = array<i32>} : memref<80x64xf32, #tpu.memory_space<vmem>>, vector<8x64xf32>,
    %cst_55 = arith.constant dense<0.000000e+00> : vector<8x256xf32>
    %182 = tpu.matmul %180, %18, %cst_55 {dimension_numbers = #tpu.dot_dimension_numbers<[1], [0], [0], [1], [0, 0, 1, 1], [], []>} : vector<8x64xf32>, vector<64x256xf32>, vector<8x256xf32> -> vector<8x256xf32>
    %c6 = arith.constant 6 : index
    %c0_56 = arith.constant 0 : index
    %c0_57 = arith.constant 0 : index
    %183 = vector.load %arg12[%c6, %c0_56, %c0_57] : memref<12x8x256xf32, #tpu.memory_space<vmem>>, vector<1x8x256xf32>
    %184 = vector.shape_cast %183 : vector<1x8x256xf32> to vector<8x256xf32>
    %185 = arith.addf %182, %184 : vector<8x256xf32>
    %186 = vector.extract_strided_slice %185 {offsets = [0, 0], sizes = [8, 128], strides = [1, 1]} : vector<8x256xf32> to vector<8x128xf32>
    %187 = arith.negf %186 : vector<8x128xf32>
    %188 = math.exp %187 : vector<8x128xf32>
    %cst_58 = arith.constant 1.000000e+00 : f32
    %189 = vector.broadcast %cst_58 : f32 to vector<8x128xf32>
    %190 = arith.addf %189, %188 : vector<8x128xf32>
    %191 = arith.divf %189, %190 : vector<8x128xf32>
    %192 = vector.extract_strided_slice %191 {offsets = [0, 0], sizes = [8, 64], strides = [1, 1]} : vector<8x128xf32> to vector<8x64xf32>
    %193 = vector.extract_strided_slice %191 {offsets = [0, 64], sizes = [8, 64], strides = [1, 1]} : vector<8x128xf32> to vector<8x64xf32>
    %194 = vector.extract_strided_slice %185 {offsets = [0, 128], sizes = [8, 64], strides = [1, 1]} : vector<8x256xf32> to vector<8x64xf32>
    %195 = math.tanh %194 : vector<8x64xf32>
    %196 = vector.extract_strided_slice %185 {offsets = [0, 192], sizes = [8, 64], strides = [1, 1]} : vector<8x256xf32> to vector<8x64xf32>
    %197 = arith.negf %196 : vector<8x64xf32>
    %198 = math.exp %197 : vector<8x64xf32>
    %cst_59 = arith.constant 1.000000e+00 : f32
    %199 = vector.broadcast %cst_59 : f32 to vector<8x64xf32>
    %200 = arith.addf %199, %198 : vector<8x64xf32>
    %201 = arith.divf %199, %200 : vector<8x64xf32>
    %202 = arith.mulf %193, %178 : vector<8x64xf32>
    %203 = arith.mulf %192, %195 : vector<8x64xf32>
    %204 = arith.addf %202, %203 : vector<8x64xf32>
    %205 = math.tanh %204 : vector<8x64xf32>
    %206 = arith.mulf %201, %205 : vector<8x64xf32>
    %c24 = arith.constant 24 : index
    %c0_60 = arith.constant 0 : index
    %207 = vector.load %arg13[%c24, %c0_60] : memref<80x64xf32, #tpu.memory_space<vmem>>, vector<8x64xf32>
    tpu.vector_store %arg13[%c24, %c0_60], %206 {strides = array<i32>} : memref<80x64xf32, #tpu.memory_space<vmem>>, vector<8x64xf32>,
    %cst_61 = arith.constant dense<0.000000e+00> : vector<8x256xf32>
    %208 = tpu.matmul %206, %18, %cst_61 {dimension_numbers = #tpu.dot_dimension_numbers<[1], [0], [0], [1], [0, 0, 1, 1], [], []>} : vector<8x64xf32>, vector<64x256xf32>, vector<8x256xf32> -> vector<8x256xf32>
    %c7 = arith.constant 7 : index
    %c0_62 = arith.constant 0 : index
    %c0_63 = arith.constant 0 : index
    %209 = vector.load %arg12[%c7, %c0_62, %c0_63] : memref<12x8x256xf32, #tpu.memory_space<vmem>>, vector<1x8x256xf32>
    %210 = vector.shape_cast %209 : vector<1x8x256xf32> to vector<8x256xf32>
    %211 = arith.addf %208, %210 : vector<8x256xf32>
    %212 = vector.extract_strided_slice %211 {offsets = [0, 0], sizes = [8, 128], strides = [1, 1]} : vector<8x256xf32> to vector<8x128xf32>
    %213 = arith.negf %212 : vector<8x128xf32>
    %214 = math.exp %213 : vector<8x128xf32>
    %cst_64 = arith.constant 1.000000e+00 : f32
    %215 = vector.broadcast %cst_64 : f32 to vector<8x128xf32>
    %216 = arith.addf %215, %214 : vector<8x128xf32>
    %217 = arith.divf %215, %216 : vector<8x128xf32>
    %218 = vector.extract_strided_slice %217 {offsets = [0, 0], sizes = [8, 64], strides = [1, 1]} : vector<8x128xf32> to vector<8x64xf32>
    %219 = vector.extract_strided_slice %217 {offsets = [0, 64], sizes = [8, 64], strides = [1, 1]} : vector<8x128xf32> to vector<8x64xf32>
    %220 = vector.extract_strided_slice %211 {offsets = [0, 128], sizes = [8, 64], strides = [1, 1]} : vector<8x256xf32> to vector<8x64xf32>
    %221 = math.tanh %220 : vector<8x64xf32>
    %222 = vector.extract_strided_slice %211 {offsets = [0, 192], sizes = [8, 64], strides = [1, 1]} : vector<8x256xf32> to vector<8x64xf32>
    %223 = arith.negf %222 : vector<8x64xf32>
    %224 = math.exp %223 : vector<8x64xf32>
    %cst_65 = arith.constant 1.000000e+00 : f32
    %225 = vector.broadcast %cst_65 : f32 to vector<8x64xf32>
    %226 = arith.addf %225, %224 : vector<8x64xf32>
    %227 = arith.divf %225, %226 : vector<8x64xf32>
    %228 = arith.mulf %219, %204 : vector<8x64xf32>
    %229 = arith.mulf %218, %221 : vector<8x64xf32>
    %230 = arith.addf %228, %229 : vector<8x64xf32>
    %231 = math.tanh %230 : vector<8x64xf32>
    %232 = arith.mulf %227, %231 : vector<8x64xf32>
    %c32_66 = arith.constant 32 : index
    %c0_67 = arith.constant 0 : index
    %233 = vector.load %arg13[%c32_66, %c0_67] : memref<80x64xf32, #tpu.memory_space<vmem>>, vector<8x64xf32>
    tpu.vector_store %arg13[%c32_66, %c0_67], %232 {strides = array<i32>} : memref<80x64xf32, #tpu.memory_space<vmem>>, vector<8x64xf32>,
    %cst_68 = arith.constant dense<0.000000e+00> : vector<8x256xf32>
    %234 = tpu.matmul %232, %18, %cst_68 {dimension_numbers = #tpu.dot_dimension_numbers<[1], [0], [0], [1], [0, 0, 1, 1], [], []>} : vector<8x64xf32>, vector<64x256xf32>, vector<8x256xf32> -> vector<8x256xf32>
    %c8_69 = arith.constant 8 : index
    %c0_70 = arith.constant 0 : index
    %c0_71 = arith.constant 0 : index
    %235 = vector.load %arg12[%c8_69, %c0_70, %c0_71] : memref<12x8x256xf32, #tpu.memory_space<vmem>>, vector<1x8x256xf32>
    %236 = vector.shape_cast %235 : vector<1x8x256xf32> to vector<8x256xf32>
    %237 = arith.addf %234, %236 : vector<8x256xf32>
    %238 = vector.extract_strided_slice %237 {offsets = [0, 0], sizes = [8, 128], strides = [1, 1]} : vector<8x256xf32> to vector<8x128xf32>
    %239 = arith.negf %238 : vector<8x128xf32>
    %240 = math.exp %239 : vector<8x128xf32>
    %cst_72 = arith.constant 1.000000e+00 : f32
    %241 = vector.broadcast %cst_72 : f32 to vector<8x128xf32>
    %242 = arith.addf %241, %240 : vector<8x128xf32>
    %243 = arith.divf %241, %242 : vector<8x128xf32>
    %244 = vector.extract_strided_slice %243 {offsets = [0, 0], sizes = [8, 64], strides = [1, 1]} : vector<8x128xf32> to vector<8x64xf32>
    %245 = vector.extract_strided_slice %243 {offsets = [0, 64], sizes = [8, 64], strides = [1, 1]} : vector<8x128xf32> to vector<8x64xf32>
    %246 = vector.extract_strided_slice %237 {offsets = [0, 128], sizes = [8, 64], strides = [1, 1]} : vector<8x256xf32> to vector<8x64xf32>
    %247 = math.tanh %246 : vector<8x64xf32>
    %248 = vector.extract_strided_slice %237 {offsets = [0, 192], sizes = [8, 64], strides = [1, 1]} : vector<8x256xf32> to vector<8x64xf32>
    %249 = arith.negf %248 : vector<8x64xf32>
    %250 = math.exp %249 : vector<8x64xf32>
    %cst_73 = arith.constant 1.000000e+00 : f32
    %251 = vector.broadcast %cst_73 : f32 to vector<8x64xf32>
    %252 = arith.addf %251, %250 : vector<8x64xf32>
    %253 = arith.divf %251, %252 : vector<8x64xf32>
    %254 = arith.mulf %245, %230 : vector<8x64xf32>
    %255 = arith.mulf %244, %247 : vector<8x64xf32>
    %256 = arith.addf %254, %255 : vector<8x64xf32>
    %257 = math.tanh %256 : vector<8x64xf32>
    %258 = arith.mulf %253, %257 : vector<8x64xf32>
    %c40 = arith.constant 40 : index
    %c0_74 = arith.constant 0 : index
    %259 = vector.load %arg13[%c40, %c0_74] : memref<80x64xf32, #tpu.memory_space<vmem>>, vector<8x64xf32>
    tpu.vector_store %arg13[%c40, %c0_74], %258 {strides = array<i32>} : memref<80x64xf32, #tpu.memory_space<vmem>>, vector<8x64xf32>,
    %cst_75 = arith.constant dense<0.000000e+00> : vector<8x256xf32>
    %260 = tpu.matmul %258, %18, %cst_75 {dimension_numbers = #tpu.dot_dimension_numbers<[1], [0], [0], [1], [0, 0, 1, 1], [], []>} : vector<8x64xf32>, vector<64x256xf32>, vector<8x256xf32> -> vector<8x256xf32>
    %c9 = arith.constant 9 : index
    %c0_76 = arith.constant 0 : index
    %c0_77 = arith.constant 0 : index
    %261 = vector.load %arg12[%c9, %c0_76, %c0_77] : memref<12x8x256xf32, #tpu.memory_space<vmem>>, vector<1x8x256xf32>
    %262 = vector.shape_cast %261 : vector<1x8x256xf32> to vector<8x256xf32>
    %263 = arith.addf %260, %262 : vector<8x256xf32>
    %264 = vector.extract_strided_slice %263 {offsets = [0, 0], sizes = [8, 128], strides = [1, 1]} : vector<8x256xf32> to vector<8x128xf32>
    %265 = arith.negf %264 : vector<8x128xf32>
    %266 = math.exp %265 : vector<8x128xf32>
    %cst_78 = arith.constant 1.000000e+00 : f32
    %267 = vector.broadcast %cst_78 : f32 to vector<8x128xf32>
    %268 = arith.addf %267, %266 : vector<8x128xf32>
    %269 = arith.divf %267, %268 : vector<8x128xf32>
    %270 = vector.extract_strided_slice %269 {offsets = [0, 0], sizes = [8, 64], strides = [1, 1]} : vector<8x128xf32> to vector<8x64xf32>
    %271 = vector.extract_strided_slice %269 {offsets = [0, 64], sizes = [8, 64], strides = [1, 1]} : vector<8x128xf32> to vector<8x64xf32>
    %272 = vector.extract_strided_slice %263 {offsets = [0, 128], sizes = [8, 64], strides = [1, 1]} : vector<8x256xf32> to vector<8x64xf32>
    %273 = math.tanh %272 : vector<8x64xf32>
    %274 = vector.extract_strided_slice %263 {offsets = [0, 192], sizes = [8, 64], strides = [1, 1]} : vector<8x256xf32> to vector<8x64xf32>
    %275 = arith.negf %274 : vector<8x64xf32>
    %276 = math.exp %275 : vector<8x64xf32>
    %cst_79 = arith.constant 1.000000e+00 : f32
    %277 = vector.broadcast %cst_79 : f32 to vector<8x64xf32>
    %278 = arith.addf %277, %276 : vector<8x64xf32>
    %279 = arith.divf %277, %278 : vector<8x64xf32>
    %280 = arith.mulf %271, %256 : vector<8x64xf32>
    %281 = arith.mulf %270, %273 : vector<8x64xf32>
    %282 = arith.addf %280, %281 : vector<8x64xf32>
    %283 = math.tanh %282 : vector<8x64xf32>
    %284 = arith.mulf %279, %283 : vector<8x64xf32>
    %c48 = arith.constant 48 : index
    %c0_80 = arith.constant 0 : index
    %285 = vector.load %arg13[%c48, %c0_80] : memref<80x64xf32, #tpu.memory_space<vmem>>, vector<8x64xf32>
    tpu.vector_store %arg13[%c48, %c0_80], %284 {strides = array<i32>} : memref<80x64xf32, #tpu.memory_space<vmem>>, vector<8x64xf32>,
    %cst_81 = arith.constant dense<0.000000e+00> : vector<8x256xf32>
    %286 = tpu.matmul %284, %18, %cst_81 {dimension_numbers = #tpu.dot_dimension_numbers<[1], [0], [0], [1], [0, 0, 1, 1], [], []>} : vector<8x64xf32>, vector<64x256xf32>, vector<8x256xf32> -> vector<8x256xf32>
    %c10 = arith.constant 10 : index
    %c0_82 = arith.constant 0 : index
    %c0_83 = arith.constant 0 : index
    %287 = vector.load %arg12[%c10, %c0_82, %c0_83] : memref<12x8x256xf32, #tpu.memory_space<vmem>>, vector<1x8x256xf32>
    %288 = vector.shape_cast %287 : vector<1x8x256xf32> to vector<8x256xf32>
    %289 = arith.addf %286, %288 : vector<8x256xf32>
    %290 = vector.extract_strided_slice %289 {offsets = [0, 0], sizes = [8, 128], strides = [1, 1]} : vector<8x256xf32> to vector<8x128xf32>
    %291 = arith.negf %290 : vector<8x128xf32>
    %292 = math.exp %291 : vector<8x128xf32>
    %cst_84 = arith.constant 1.000000e+00 : f32
    %293 = vector.broadcast %cst_84 : f32 to vector<8x128xf32>
    %294 = arith.addf %293, %292 : vector<8x128xf32>
    %295 = arith.divf %293, %294 : vector<8x128xf32>
    %296 = vector.extract_strided_slice %295 {offsets = [0, 0], sizes = [8, 64], strides = [1, 1]} : vector<8x128xf32> to vector<8x64xf32>
    %297 = vector.extract_strided_slice %295 {offsets = [0, 64], sizes = [8, 64], strides = [1, 1]} : vector<8x128xf32> to vector<8x64xf32>
    %298 = vector.extract_strided_slice %289 {offsets = [0, 128], sizes = [8, 64], strides = [1, 1]} : vector<8x256xf32> to vector<8x64xf32>
    %299 = math.tanh %298 : vector<8x64xf32>
    %300 = vector.extract_strided_slice %289 {offsets = [0, 192], sizes = [8, 64], strides = [1, 1]} : vector<8x256xf32> to vector<8x64xf32>
    %301 = arith.negf %300 : vector<8x64xf32>
    %302 = math.exp %301 : vector<8x64xf32>
    %cst_85 = arith.constant 1.000000e+00 : f32
    %303 = vector.broadcast %cst_85 : f32 to vector<8x64xf32>
    %304 = arith.addf %303, %302 : vector<8x64xf32>
    %305 = arith.divf %303, %304 : vector<8x64xf32>
    %306 = arith.mulf %297, %282 : vector<8x64xf32>
    %307 = arith.mulf %296, %299 : vector<8x64xf32>
    %308 = arith.addf %306, %307 : vector<8x64xf32>
    %309 = math.tanh %308 : vector<8x64xf32>
    %310 = arith.mulf %305, %309 : vector<8x64xf32>
    %c56 = arith.constant 56 : index
    %c0_86 = arith.constant 0 : index
    %311 = vector.load %arg13[%c56, %c0_86] : memref<80x64xf32, #tpu.memory_space<vmem>>, vector<8x64xf32>
    tpu.vector_store %arg13[%c56, %c0_86], %310 {strides = array<i32>} : memref<80x64xf32, #tpu.memory_space<vmem>>, vector<8x64xf32>,
    %cst_87 = arith.constant dense<0.000000e+00> : vector<8x256xf32>
    %312 = tpu.matmul %310, %18, %cst_87 {dimension_numbers = #tpu.dot_dimension_numbers<[1], [0], [0], [1], [0, 0, 1, 1], [], []>} : vector<8x64xf32>, vector<64x256xf32>, vector<8x256xf32> -> vector<8x256xf32>
    %c11 = arith.constant 11 : index
    %c0_88 = arith.constant 0 : index
    %c0_89 = arith.constant 0 : index
    %313 = vector.load %arg12[%c11, %c0_88, %c0_89] : memref<12x8x256xf32, #tpu.memory_space<vmem>>, vector<1x8x256xf32>
    %314 = vector.shape_cast %313 : vector<1x8x256xf32> to vector<8x256xf32>
    %315 = arith.addf %312, %314 : vector<8x256xf32>
    %316 = vector.extract_strided_slice %315 {offsets = [0, 0], sizes = [8, 128], strides = [1, 1]} : vector<8x256xf32> to vector<8x128xf32>
    %317 = arith.negf %316 : vector<8x128xf32>
    %318 = math.exp %317 : vector<8x128xf32>
    %cst_90 = arith.constant 1.000000e+00 : f32
    %319 = vector.broadcast %cst_90 : f32 to vector<8x128xf32>
    %320 = arith.addf %319, %318 : vector<8x128xf32>
    %321 = arith.divf %319, %320 : vector<8x128xf32>
    %322 = vector.extract_strided_slice %321 {offsets = [0, 0], sizes = [8, 64], strides = [1, 1]} : vector<8x128xf32> to vector<8x64xf32>
    %323 = vector.extract_strided_slice %321 {offsets = [0, 64], sizes = [8, 64], strides = [1, 1]} : vector<8x128xf32> to vector<8x64xf32>
    %324 = vector.extract_strided_slice %315 {offsets = [0, 128], sizes = [8, 64], strides = [1, 1]} : vector<8x256xf32> to vector<8x64xf32>
    %325 = math.tanh %324 : vector<8x64xf32>
    %326 = vector.extract_strided_slice %315 {offsets = [0, 192], sizes = [8, 64], strides = [1, 1]} : vector<8x256xf32> to vector<8x64xf32>
    %327 = arith.negf %326 : vector<8x64xf32>
    %328 = math.exp %327 : vector<8x64xf32>
    %cst_91 = arith.constant 1.000000e+00 : f32
    %329 = vector.broadcast %cst_91 : f32 to vector<8x64xf32>
    %330 = arith.addf %329, %328 : vector<8x64xf32>
    %331 = arith.divf %329, %330 : vector<8x64xf32>
    %332 = arith.mulf %323, %308 : vector<8x64xf32>
    %333 = arith.mulf %322, %325 : vector<8x64xf32>
    %334 = arith.addf %332, %333 : vector<8x64xf32>
    %335 = math.tanh %334 : vector<8x64xf32>
    %336 = arith.mulf %331, %335 : vector<8x64xf32>
    %c64 = arith.constant 64 : index
    %c0_92 = arith.constant 0 : index
    %337 = vector.load %arg13[%c64, %c0_92] : memref<80x64xf32, #tpu.memory_space<vmem>>, vector<8x64xf32>
    tpu.vector_store %arg13[%c64, %c0_92], %336 {strides = array<i32>} : memref<80x64xf32, #tpu.memory_space<vmem>>, vector<8x64xf32>,
    %cst_93 = arith.constant dense<0.000000e+00> : vector<8x256xf32>
    %338 = tpu.matmul %336, %18, %cst_93 {dimension_numbers = #tpu.dot_dimension_numbers<[1], [0], [0], [1], [0, 0, 1, 1], [], []>} : vector<8x64xf32>, vector<64x256xf32>, vector<8x256xf32> -> vector<8x256xf32>
    %c11_94 = arith.constant 11 : index
    %c0_95 = arith.constant 0 : index
    %c0_96 = arith.constant 0 : index
    %339 = vector.load %arg12[%c11_94, %c0_95, %c0_96] : memref<12x8x256xf32, #tpu.memory_space<vmem>>, vector<1x8x256xf32>
    %340 = vector.shape_cast %339 : vector<1x8x256xf32> to vector<8x256xf32>
    %341 = arith.addf %338, %340 : vector<8x256xf32>
    %342 = vector.extract_strided_slice %341 {offsets = [0, 0], sizes = [8, 128], strides = [1, 1]} : vector<8x256xf32> to vector<8x128xf32>
    %343 = arith.negf %342 : vector<8x128xf32>
    %344 = math.exp %343 : vector<8x128xf32>
    %cst_97 = arith.constant 1.000000e+00 : f32
    %345 = vector.broadcast %cst_97 : f32 to vector<8x128xf32>
    %346 = arith.addf %345, %344 : vector<8x128xf32>
    %347 = arith.divf %345, %346 : vector<8x128xf32>
    %348 = vector.extract_strided_slice %347 {offsets = [0, 0], sizes = [8, 64], strides = [1, 1]} : vector<8x128xf32> to vector<8x64xf32>
    %349 = vector.extract_strided_slice %347 {offsets = [0, 64], sizes = [8, 64], strides = [1, 1]} : vector<8x128xf32> to vector<8x64xf32>
    %350 = vector.extract_strided_slice %341 {offsets = [0, 128], sizes = [8, 64], strides = [1, 1]} : vector<8x256xf32> to vector<8x64xf32>
    %351 = math.tanh %350 : vector<8x64xf32>
    %352 = vector.extract_strided_slice %341 {offsets = [0, 192], sizes = [8, 64], strides = [1, 1]} : vector<8x256xf32> to vector<8x64xf32>
    %353 = arith.negf %352 : vector<8x64xf32>
    %354 = math.exp %353 : vector<8x64xf32>
    %cst_98 = arith.constant 1.000000e+00 : f32
    %355 = vector.broadcast %cst_98 : f32 to vector<8x64xf32>
    %356 = arith.addf %355, %354 : vector<8x64xf32>
    %357 = arith.divf %355, %356 : vector<8x64xf32>
    %358 = arith.mulf %349, %334 : vector<8x64xf32>
    %359 = arith.mulf %348, %351 : vector<8x64xf32>
    %360 = arith.addf %358, %359 : vector<8x64xf32>
    %361 = math.tanh %360 : vector<8x64xf32>
    %362 = arith.mulf %357, %361 : vector<8x64xf32>
    %c32_i32_99 = arith.constant 32 : i32
    %363 = vector.broadcast %c32_i32_99 : i32 to vector<8x64xi32>
    %364 = arith.cmpi sge, %21, %363 : vector<8x64xi32>
    %c64_i32 = arith.constant 64 : i32
    %365 = vector.broadcast %c64_i32 : i32 to vector<8x64xi32>
    %366 = arith.cmpi slt, %21, %365 : vector<8x64xi32>
    %367 = arith.andi %364, %366 : vector<8x64xi1>
    %368 = arith.select %367, %362, %336 : vector<8x64xi1>, vector<8x64xf32>
    %c72 = arith.constant 72 : index
    %c0_100 = arith.constant 0 : index
    %369 = vector.load %arg13[%c72, %c0_100] : memref<80x64xf32, #tpu.memory_space<vmem>>, vector<8x64xf32>
    tpu.vector_store %arg13[%c72, %c0_100], %368 {strides = array<i32>} : memref<80x64xf32, #tpu.memory_space<vmem>>, vector<8x64xf32>,
    %c0_101 = arith.constant 0 : index
    %c0_102 = arith.constant 0 : index
    %370 = vector.load %arg13[%c0_101, %c0_102] : memref<80x64xf32, #tpu.memory_space<vmem>>, vector<80x64xf32>
    %c0_103 = arith.constant 0 : index
    %c0_104 = arith.constant 0 : index
    %371 = vector.load %arg7[%c0_103, %c0_104] : memref<64x8xf32, #tpu.memory_space<vmem>>, vector<64x8xf32>
    %cst_105 = arith.constant dense<0.000000e+00> : vector<80x8xf32>
    %372 = tpu.matmul %370, %371, %cst_105 {dimension_numbers = #tpu.dot_dimension_numbers<[1], [0], [0], [1], [0, 0, 1, 1], [], []>} : vector<80x64xf32>, vector<64x8xf32>, vector<80x8xf32> -> vector<80x8xf32>
    %c0_106 = arith.constant 0 : index
    %c0_107 = arith.constant 0 : index
    %373 = vector.load %arg8[%c0_106, %c0_107] : memref<1x8xf32, #tpu.memory_space<vmem>>, vector<1x8xf32>
    %374 = vector.broadcast %373 : vector<1x8xf32> to vector<80x8xf32>
    %375 = arith.addf %372, %374 : vector<80x8xf32>
    %cst_108 = arith.constant 0.000000e+00 : f32
    %376 = vector.broadcast %cst_108 : f32 to vector<80x8xf32>
    %377 = arith.maximumf %375, %376 : vector<80x8xf32>
    %378 = vector.shape_cast %377 : vector<80x8xf32> to vector<10x8x8xf32>
    %cst_109 = arith.constant dense<0.000000e+00> : vector<8x8xf32>
    %379 = vector.multi_reduction <add>, %378, %cst_109 [0] : vector<10x8x8xf32> to vector<8x8xf32>
    %c0_110 = arith.constant 0 : index
    %c0_111 = arith.constant 0 : index
    %380 = vector.load %arg9[%c0_110, %c0_111] : memref<8x4xf32, #tpu.memory_space<vmem>>, vector<8x4xf32>
    %cst_112 = arith.constant dense<0.000000e+00> : vector<8x4xf32>
    %381 = tpu.matmul %379, %380, %cst_112 {dimension_numbers = #tpu.dot_dimension_numbers<[1], [0], [0], [1], [0, 0, 1, 1], [], []>} : vector<8x8xf32>, vector<8x4xf32>, vector<8x4xf32> -> vector<8x4xf32>
    %c0_113 = arith.constant 0 : index
    %c0_114 = arith.constant 0 : index
    %382 = vector.load %arg10[%c0_113, %c0_114] : memref<1x4xf32, #tpu.memory_space<vmem>>, vector<1x4xf32>
    %383 = vector.broadcast %382 : vector<1x4xf32> to vector<8x4xf32>
    %384 = arith.addf %381, %383 : vector<8x4xf32>
    %cst_115 = arith.constant dense<0xFF800000> : vector<8xf32>
    %385 = vector.multi_reduction <maximumf>, %384, %cst_115 [1] : vector<8x4xf32> to vector<8xf32>
    %386 = vector.shape_cast %385 : vector<8xf32> to vector<8x1xf32>
    %387 = vector.broadcast %386 : vector<8x1xf32> to vector<8x4xf32>
    %388 = arith.subf %384, %387 : vector<8x4xf32>
    %389 = math.exp %388 : vector<8x4xf32>
    %cst_116 = arith.constant dense<0.000000e+00> : vector<8xf32>
    %390 = vector.multi_reduction <add>, %389, %cst_116 [1] : vector<8x4xf32> to vector<8xf32>
    %391 = vector.shape_cast %390 : vector<8xf32> to vector<8x1xf32>
    %392 = vector.broadcast %391 : vector<8x1xf32> to vector<8x4xf32>
    %393 = arith.divf %389, %392 : vector<8x4xf32>
    %c0_117 = arith.constant 0 : index
    %c0_118 = arith.constant 0 : index
    %394 = vector.load %arg11[%c0_117, %c0_118] : memref<8x4xf32, #tpu.memory_space<vmem>>, vector<8x4xf32>
    tpu.vector_store %arg11[%c0_117, %c0_118], %393 {strides = array<i32>} : memref<8x4xf32, #tpu.memory_space<vmem>>, vector<8x4xf32>,
    return
  }
}

</mosaic_0001>

<llo_original>
// kernel: decoder_forward.1
$region0: #{decoder_forward.1}
  #allocation0 [shape = 'u32[]', space=smem, size = 0x4, offset = 0x4, fixed_abs, tag = 'smem constant byte address 0x4 - core index']
  #allocation1 [shape = 'u32[144,128]{1,0:T(1,128)}', space=vmem, size = 0x12000, scoped, tag = 'internal scratch']
  #allocation2 [shape = 'f32[12,8,256]{2,1,0:T(8,128)}', space=vmem, size = 0x18000, scoped, tag = 'scratch operand']
  #allocation3 [shape = 'f32[80,64]{1,0:T(8,128)}', space=vmem, size = 0xa000, scoped, tag = 'scratch operand']
  %s0 = inlined_call_operand.vmem [shape: f32[96,8], index: 0, kind: input, shape index: {}]
  %s1 = inlined_call_operand.vmem [shape: f32[8,64], index: 1, kind: input, shape index: {}]
  %s2 = inlined_call_operand.vmem [shape: f32[8,64], index: 2, kind: input, shape index: {}]
  %s3 = inlined_call_operand.vmem [shape: f32[8,256], index: 3, kind: input, shape index: {}]
  %s4 = inlined_call_operand.vmem [shape: f32[32,256], index: 4, kind: input, shape index: {}]
  %s5 = inlined_call_operand.vmem [shape: f32[1,256], index: 5, kind: input, shape index: {}]
  %s6 = inlined_call_operand.vmem [shape: f32[64,256], index: 6, kind: input, shape index: {}]
  %s7 = inlined_call_operand.vmem [shape: f32[64,8], index: 7, kind: input, shape index: {}]
  %s8 = inlined_call_operand.vmem [shape: f32[1,8], index: 8, kind: input, shape index: {}]
  %s9 = inlined_call_operand.vmem [shape: f32[8,4], index: 9, kind: input, shape index: {}]
  %s10 = inlined_call_operand.vmem [shape: f32[1,4], index: 10, kind: input, shape index: {}]
  %s11 = inlined_call_operand.vmem [shape: f32[8,4], index: 11, kind: output, shape index: {}]
  %s12 = sld [smem:[#allocation0]]
  $region54: #{decoder_forward.1} parent=0
    _
  %s14 = ssub.s32 1, %s12
  %s15 = scalar_select 0, %s14, %s12
  // Predicated region
  $region2: #{decoder_forward.1} parent=0 // pred_check
    _
  $region3: #{decoder_forward.1} parent=0 // pred_check_branch
    %17 = sbr.rel (0) target = $region5
  $region4: #{decoder_forward.1} parent=0 // pred_region
    _
  $region5: #{decoder_forward.1} parent=0 // pred_fallthru
    _
  // Predicated region
  $region6: #{decoder_forward.1} parent=0 // pred_check
    _
  $region7: #{decoder_forward.1} parent=0 // pred_check_branch
    %19 = sbr.rel (0) target = $region9
  $region8: #{decoder_forward.1} parent=0 // pred_region
    _
  $region9: #{decoder_forward.1} parent=0 // pred_fallthru
    _
  // Predicated region
  $region10: #{decoder_forward.1} parent=0 // pred_check
    _
  $region11: #{decoder_forward.1} parent=0 // pred_check_branch
    %21 = sbr.rel (0) target = $region13
  $region12: #{decoder_forward.1} parent=0 // pred_region
    _
  $region13: #{decoder_forward.1} parent=0 // pred_fallthru
    _
  // Predicated region
  $region14: #{decoder_forward.1} parent=0 // pred_check
    _
  $region15: #{decoder_forward.1} parent=0 // pred_check_branch
    %23 = sbr.rel (0) target = $region17
  $region16: #{decoder_forward.1} parent=0 // pred_region
    _
  $region17: #{decoder_forward.1} parent=0 // pred_fallthru
    _
  // Predicated region
  $region18: #{decoder_forward.1} parent=0 // pred_check
    _
  $region19: #{decoder_forward.1} parent=0 // pred_check_branch
    %25 = sbr.rel (0) target = $region21
  $region20: #{decoder_forward.1} parent=0 // pred_region
    _
  $region21: #{decoder_forward.1} parent=0 // pred_fallthru
    _
  // Predicated region
  $region22: #{decoder_forward.1} parent=0 // pred_check
    _
  $region23: #{decoder_forward.1} parent=0 // pred_check_branch
    %27 = sbr.rel (0) target = $region25
  $region24: #{decoder_forward.1} parent=0 // pred_region
    _
  $region25: #{decoder_forward.1} parent=0 // pred_fallthru
    _
  // Predicated region
  $region26: #{decoder_forward.1} parent=0 // pred_check
    _
  $region27: #{decoder_forward.1} parent=0 // pred_check_branch
    %29 = sbr.rel (0) target = $region29
  $region28: #{decoder_forward.1} parent=0 // pred_region
    _
  $region29: #{decoder_forward.1} parent=0 // pred_fallthru
    _
  // Predicated region
  $region30: #{decoder_forward.1} parent=0 // pred_check
    _
  $region31: #{decoder_forward.1} parent=0 // pred_check_branch
    %31 = sbr.rel (0) target = $region33
  $region32: #{decoder_forward.1} parent=0 // pred_region
    _
  $region33: #{decoder_forward.1} parent=0 // pred_fallthru
    _
  // Predicated region
  $region34: #{decoder_forward.1} parent=0 // pred_check
    _
  $region35: #{decoder_forward.1} parent=0 // pred_check_branch
    %33 = sbr.rel (0) target = $region37
  $region36: #{decoder_forward.1} parent=0 // pred_region
    _
  $region37: #{decoder_forward.1} parent=0 // pred_fallthru
    _
  // Predicated region
  $region38: #{decoder_forward.1} parent=0 // pred_check
    _
  $region39: #{decoder_forward.1} parent=0 // pred_check_branch
    %35 = sbr.rel (0) target = $region41
  $region40: #{decoder_forward.1} parent=0 // pred_region
    _
  $region41: #{decoder_forward.1} parent=0 // pred_fallthru
    _
  // Predicated region
  $region42: #{decoder_forward.1} parent=0 // pred_check
    _
  $region43: #{decoder_forward.1} parent=0 // pred_check_branch
    %37 = sbr.rel (0) target = $region45
  $region44: #{decoder_forward.1} parent=0 // pred_region
    _
  $region45: #{decoder_forward.1} parent=0 // pred_fallthru
    _
  %v38 = vld [vmem:[%s2] sm:$0xff]
  %v39 = vmax.f32 %v38, 0.0
  %v40 = vld [vmem:[%s4] sm:$0xff]
  %v41 = vld [vmem:[%s4 + $0x8] sm:$0xff]
  %v42 = vld [vmem:[%s4 + $0x10] sm:$0xff]
  %v43 = vld [vmem:[%s4 + $0x18] sm:$0xff]
  %v44 = vld [vmem:[%s4 + $0x20] sm:$0xff]
  %v45 = vld [vmem:[%s4 + $0x28] sm:$0xff]
  %v46 = vld [vmem:[%s4 + $0x30] sm:$0xff]
  %v47 = vld [vmem:[%s4 + $0x38] sm:$0xff]
  %v48 = vld [vmem:[%s5] sm:$0x3]
  %v50 = vlaneseq
  %v51 = vshrl.u32 %v50, 7
  %v52 = vsub.s32 0, %v51
  %v53 = vrot.slane %v48, %v52
  %v54 = vlaneseq
  %v55 = vshrl.u32 %v54, 7
  %v56 = vsub.s32 1, %v55
  %v57 = vrot.slane %v48, %v56
  %61 = vrot.lane.b32.xlu0 %v39, 96
  %v62 = vpop.permute.xlu0 %61
  %vm63 = vcmask 261120
  %v64 = vsel %vm63, %v62, 0
  %66 = vmatprep.subr.mxu0 %v41
  %67 = vmatpush1.msra.mxu0 %v40
  %68 = vmatprep.subr.mxu0 %v43
  %69 = vmatpush1.msra.mxu0 %v42
  %70 = vmatprep.subr.mxu0 %v45
  %71 = vmatpush1.msra.mxu0 %v44
  %72 = vmatprep.subr.mxu0 %v47
  %73 = vmatpush1.msra.mxu0 %v46
  %74 = vmatprep.subr.mxu0 0.0
  %75 = vmatpush1.msra.mxu0 0.0
  %76 = vmatprep.subr.mxu0 0.0
  %77 = vmatpush1.msra.mxu0 0.0
  %78 = vmatprep.subr.mxu0 0.0
  %79 = vmatpush1.msra.mxu0 0.0
  %80 = vmatprep.subr.mxu0 0.0
  %81 = vmatpush1.msra.mxu0 0.0
  %82 = vmatprep.subr.mxu0 0.0
  %83 = vmatpush1.msra.mxu0 0.0
  %84 = vmatprep.subr.mxu0 0.0
  %85 = vmatpush1.msra.mxu0 0.0
  %86 = vmatprep.subr.mxu0 0.0
  %87 = vmatpush1.msra.mxu0 0.0
  %88 = vmatprep.subr.mxu0 0.0
  %89 = vmatpush1.msra.mxu0 0.0
  %90 = vmatprep.subr.mxu0 0.0
  %91 = vmatpush1.msra.mxu0 0.0
  %92 = vmatprep.subr.mxu0 0.0
  %93 = vmatpush1.msra.mxu0 0.0
  %94 = vmatprep.subr.mxu0 0.0
  %95 = vmatpush1.msra.mxu0 0.0
  %96 = vmatprep.subr.mxu0 0.0
  %97 = vmatpush1.msra.mxu0 0.0
  %98 = vmatprep.subr.mxu0 0.0
  %99 = vmatpush1.msra.mxu0 0.0
  %100 = vmatprep.subr.mxu0 0.0
  %101 = vmatpush1.msra.mxu0 0.0
  %102 = vmatprep.subr.mxu0 0.0
  %103 = vmatpush1.msra.mxu0 0.0
  %104 = vmatprep.subr.mxu0 0.0
  %105 = vmatpush1.msra.mxu0 0.0
  %106 = vmatprep.subr.mxu0 0.0
  %107 = vmatpush1.msra.mxu0 0.0
  %108 = vmatprep.subr.mxu0 0.0
  %109 = vmatpush1.msra.mxu0 0.0
  %110 = vmatprep.subr.mxu0 0.0
  %111 = vmatpush1.msra.mxu0 0.0
  %112 = vmatprep.subr.mxu0 0.0
  %113 = vmatpush1.msra.mxu0 0.0
  %114 = vmatprep.subr.mxu0 0.0
  %115 = vmatpush1.msra.mxu0 0.0
  %116 = vmatprep.subr.mxu0 0.0
  %117 = vmatpush1.msra.mxu0 0.0
  %118 = vmatprep.subr.mxu0 0.0
  %119 = vmatpush1.msra.mxu0 0.0
  %120 = vmatprep.subr.mxu0 0.0
  %121 = vmatpush1.msra.mxu0 0.0
  %122 = vmatprep.subr.mxu0 0.0
  %123 = vmatpush1.msra.mxu0 0.0
  %124 = vmatprep.subr.mxu0 0.0
  %125 = vmatpush1.msra.mxu0 0.0
  %126 = vmatprep.subr.mxu0 0.0
  %127 = vmatpush1.msra.mxu0 0.0
  %128 = vmatprep.subr.mxu0 0.0
  %129 = vmatpush1.msra.mxu0 0.0
  %130 = vmatprep.mubr.f32.mxu0 0.0
  %131 = vmatmul.mubr.f32.gmra.mrb[0].mxu0 %v64
  %v132 = vpop.f32.mrb[0].mxu0
  %v133 = vadd.f32 %v53, %v132
  %v134 = vpop.f32.mrb[0].mxu0
  %v135 = vadd.f32 %v57, %v134
  %136 = vdwg.mxu0
  %v137 = vld [vmem:[%s0] sm:$0xff]
  %v138 = vld [vmem:[%s0 + $0x8] sm:$0xff]
  %v139 = vld [vmem:[%s0 + $0x10] sm:$0xff]
  %v140 = vld [vmem:[%s0 + $0x18] sm:$0xff]
  %v141 = vld [vmem:[%s0 + $0x20] sm:$0xff]
  %v142 = vld [vmem:[%s0 + $0x28] sm:$0xff]
  %v143 = vld [vmem:[%s0 + $0x30] sm:$0xff]
  %v144 = vld [vmem:[%s0 + $0x38] sm:$0xff]
  %v145 = vld [vmem:[%s0 + $0x40] sm:$0xff]
  %v146 = vld [vmem:[%s0 + $0x48] sm:$0xff]
  %v147 = vld [vmem:[%s0 + $0x50] sm:$0xff]
  %v148 = vld [vmem:[%s0 + $0x58] sm:$0xff]
  %v149 = vmax.f32 %v137, 0.0
  %v150 = vmax.f32 %v138, 0.0
  %v151 = vmax.f32 %v139, 0.0
  %v152 = vmax.f32 %v140, 0.0
  %v153 = vmax.f32 %v141, 0.0
  %v154 = vmax.f32 %v142, 0.0
  %v155 = vmax.f32 %v143, 0.0
  %v156 = vmax.f32 %v144, 0.0
  %v157 = vmax.f32 %v145, 0.0
  %v158 = vmax.f32 %v146, 0.0
  %v159 = vmax.f32 %v147, 0.0
  %v160 = vmax.f32 %v148, 0.0
  %v161 = vld [vmem:[%s3] sm:$0xff]
  %v162 = vld [vmem:[%s3 + $0x8] sm:$0xff]
  %vm163 = vcmask 64512
  %v165 = vsel %vm163, %v149, 0
  %v168 = vsel %vm163, %v150, 0
  %v171 = vsel %vm163, %v151, 0
  %v174 = vsel %vm163, %v152, 0
  %v177 = vsel %vm163, %v153, 0
  %v180 = vsel %vm163, %v154, 0
  %v183 = vsel %vm163, %v155, 0
  %v186 = vsel %vm163, %v156, 0
  %v189 = vsel %vm163, %v157, 0
  %v192 = vsel %vm163, %v158, 0
  %v195 = vsel %vm163, %v159, 0
  %v198 = vsel %vm163, %v160, 0
  %200 = vmatprep.subr.mxu0 %v162
  %201 = vmatpush1.msra.mxu0 %v161
  %202 = vmatprep.subr.mxu0 0.0
  %203 = vmatpush1.msra.mxu0 0.0
  %204 = vmatprep.subr.mxu0 0.0
  %205 = vmatpush1.msra.mxu0 0.0
  %206 = vmatprep.subr.mxu0 0.0
  %207 = vmatpush1.msra.mxu0 0.0
  %208 = vmatprep.subr.mxu0 0.0
  %209 = vmatpush1.msra.mxu0 0.0
  %210 = vmatprep.subr.mxu0 0.0
  %211 = vmatpush1.msra.mxu0 0.0
  %212 = vmatprep.subr.mxu0 0.0
  %213 = vmatpush1.msra.mxu0 0.0
  %214 = vmatprep.subr.mxu0 0.0
  %215 = vmatpush1.msra.mxu0 0.0
  %216 = vmatprep.subr.mxu0 0.0
  %217 = vmatpush1.msra.mxu0 0.0
  %218 = vmatprep.subr.mxu0 0.0
  %219 = vmatpush1.msra.mxu0 0.0
  %220 = vmatprep.subr.mxu0 0.0
  %221 = vmatpush1.msra.mxu0 0.0
  %222 = vmatprep.subr.mxu0 0.0
  %223 = vmatpush1.msra.mxu0 0.0
  %224 = vmatprep.subr.mxu0 0.0
  %225 = vmatpush1.msra.mxu0 0.0
  %226 = vmatprep.subr.mxu0 0.0
  %227 = vmatpush1.msra.mxu0 0.0
  %228 = vmatprep.subr.mxu0 0.0
  %229 = vmatpush1.msra.mxu0 0.0
  %230 = vmatprep.subr.mxu0 0.0
  %231 = vmatpush1.msra.mxu0 0.0
  %232 = vmatprep.subr.mxu0 0.0
  %233 = vmatpush1.msra.mxu0 0.0
  %234 = vmatprep.subr.mxu0 0.0
  %235 = vmatpush1.msra.mxu0 0.0
  %236 = vmatprep.subr.mxu0 0.0
  %237 = vmatpush1.msra.mxu0 0.0
  %238 = vmatprep.subr.mxu0 0.0
  %239 = vmatpush1.msra.mxu0 0.0
  %240 = vmatprep.subr.mxu0 0.0
  %241 = vmatpush1.msra.mxu0 0.0
  %242 = vmatprep.subr.mxu0 0.0
  %243 = vmatpush1.msra.mxu0 0.0
  %244 = vmatprep.subr.mxu0 0.0
  %245 = vmatpush1.msra.mxu0 0.0
  %246 = vmatprep.subr.mxu0 0.0
  %247 = vmatpush1.msra.mxu0 0.0
  %248 = vmatprep.subr.mxu0 0.0
  %249 = vmatpush1.msra.mxu0 0.0
  %250 = vmatprep.subr.mxu0 0.0
  %251 = vmatpush1.msra.mxu0 0.0
  %252 = vmatprep.subr.mxu0 0.0
  %253 = vmatpush1.msra.mxu0 0.0
  %254 = vmatprep.subr.mxu0 0.0
  %255 = vmatpush1.msra.mxu0 0.0
  %256 = vmatprep.subr.mxu0 0.0
  %257 = vmatpush1.msra.mxu0 0.0
  %258 = vmatprep.subr.mxu0 0.0
  %259 = vmatpush1.msra.mxu0 0.0
  %260 = vmatprep.subr.mxu0 0.0
  %261 = vmatpush1.msra.mxu0 0.0
  %262 = vmatprep.subr.mxu0 0.0
  %263 = vmatpush1.msra.mxu0 0.0
  %264 = vmatprep.mubr.f32.mxu0 0.0
  %265 = vmatmul.mubr.f32.gmra.mrb[0].mxu0 %v165
  %v266 = vpop.f32.mrb[0].mxu0
  %v267 = vadd.f32 0.0, %v266
  %v268 = vpop.f32.mrb[0].mxu0
  %v269 = vadd.f32 0.0, %v268
  %270 = vmatprep.mubr.f32.mxu0 0.0
  %271 = vmatmul.mubr.f32.gmra.mrb[0].mxu0 %v168
  %v272 = vpop.f32.mrb[0].mxu0
  %v273 = vadd.f32 0.0, %v272
  %v274 = vpop.f32.mrb[0].mxu0
  %v275 = vadd.f32 0.0, %v274
  %276 = vmatprep.mubr.f32.mxu0 0.0
  %277 = vmatmul.mubr.f32.gmra.mrb[0].mxu0 %v171
  %v278 = vpop.f32.mrb[0].mxu0
  %v279 = vadd.f32 0.0, %v278
  %v280 = vpop.f32.mrb[0].mxu0
  %v281 = vadd.f32 0.0, %v280
  %282 = vmatprep.mubr.f32.mxu0 0.0
  %283 = vmatmul.mubr.f32.gmra.mrb[0].mxu0 %v174
  %v284 = vpop.f32.mrb[0].mxu0
  %v285 = vadd.f32 0.0, %v284
  %v286 = vpop.f32.mrb[0].mxu0
  %v287 = vadd.f32 0.0, %v286
  %288 = vmatprep.mubr.f32.mxu0 0.0
  %289 = vmatmul.mubr.f32.gmra.mrb[0].mxu0 %v177
  %v290 = vpop.f32.mrb[0].mxu0
  %v291 = vadd.f32 0.0, %v290
  %v292 = vpop.f32.mrb[0].mxu0
  %v293 = vadd.f32 0.0, %v292
  %294 = vmatprep.mubr.f32.mxu0 0.0
  %295 = vmatmul.mubr.f32.gmra.mrb[0].mxu0 %v180
  %v296 = vpop.f32.mrb[0].mxu0
  %v297 = vadd.f32 0.0, %v296
  %v298 = vpop.f32.mrb[0].mxu0
  %v299 = vadd.f32 0.0, %v298
  %300 = vmatprep.mubr.f32.mxu0 0.0
  %301 = vmatmul.mubr.f32.gmra.mrb[0].mxu0 %v183
  %v302 = vpop.f32.mrb[0].mxu0
  %v303 = vadd.f32 0.0, %v302
  %v304 = vpop.f32.mrb[0].mxu0
  %v305 = vadd.f32 0.0, %v304
  %306 = vmatprep.mubr.f32.mxu0 0.0
  %307 = vmatmul.mubr.f32.gmra.mrb[0].mxu0 %v186
  %v308 = vpop.f32.mrb[0].mxu0
  %v309 = vadd.f32 0.0, %v308
  %v310 = vpop.f32.mrb[0].mxu0
  %v311 = vadd.f32 0.0, %v310
  %312 = vmatprep.mubr.f32.mxu0 0.0
  %313 = vmatmul.mubr.f32.gmra.mrb[0].mxu0 %v189
  %v314 = vpop.f32.mrb[0].mxu0
  %v315 = vadd.f32 0.0, %v314
  %v316 = vpop.f32.mrb[0].mxu0
  %v317 = vadd.f32 0.0, %v316
  %318 = vmatprep.mubr.f32.mxu0 0.0
  %319 = vmatmul.mubr.f32.gmra.mrb[0].mxu0 %v192
  %v320 = vpop.f32.mrb[0].mxu0
  %v321 = vadd.f32 0.0, %v320
  %v322 = vpop.f32.mrb[0].mxu0
  %v323 = vadd.f32 0.0, %v322
  %324 = vmatprep.mubr.f32.mxu0 0.0
  %325 = vmatmul.mubr.f32.gmra.mrb[0].mxu0 %v195
  %v326 = vpop.f32.mrb[0].mxu0
  %v327 = vadd.f32 0.0, %v326
  %v328 = vpop.f32.mrb[0].mxu0
  %v329 = vadd.f32 0.0, %v328
  %330 = vmatprep.mubr.f32.mxu0 0.0
  %331 = vmatmul.mubr.f32.gmra.mrb[0].mxu0 %v198
  %v332 = vpop.f32.mrb[0].mxu0
  %v333 = vadd.f32 0.0, %v332
  %v334 = vpop.f32.mrb[0].mxu0
  %v335 = vadd.f32 0.0, %v334
  %336 = vdwg.mxu0
  %v337 = vadd.f32 %v267, %v133
  %v338 = vadd.f32 %v269, %v135
  %v339 = vadd.f32 %v273, %v133
  %v340 = vadd.f32 %v275, %v135
  %v341 = vadd.f32 %v279, %v133
  %v342 = vadd.f32 %v281, %v135
  %v343 = vadd.f32 %v285, %v133
  %v344 = vadd.f32 %v287, %v135
  %v345 = vadd.f32 %v291, %v133
  %v346 = vadd.f32 %v293, %v135
  %v347 = vadd.f32 %v297, %v133
  %v348 = vadd.f32 %v299, %v135
  %v349 = vadd.f32 %v303, %v133
  %v350 = vadd.f32 %v305, %v135
  %v351 = vadd.f32 %v309, %v133
  %v352 = vadd.f32 %v311, %v135
  %v353 = vadd.f32 %v315, %v133
  %v354 = vadd.f32 %v317, %v135
  %v355 = vadd.f32 %v321, %v133
  %v356 = vadd.f32 %v323, %v135
  %v357 = vadd.f32 %v327, %v133
  %v358 = vadd.f32 %v329, %v135
  %v359 = vadd.f32 %v333, %v133
  %v360 = vadd.f32 %v335, %v135
  %361 = vst [vmem:[#allocation2] sm:$0xff] %v337
  %362 = vst [vmem:[#allocation2 + $0x8] sm:$0xff] %v338
  %363 = vst [vmem:[#allocation2 + $0x10] sm:$0xff] %v339
  %364 = vst [vmem:[#allocation2 + $0x18] sm:$0xff] %v340
  %365 = vst [vmem:[#allocation2 + $0x20] sm:$0xff] %v341
  %366 = vst [vmem:[#allocation2 + $0x28] sm:$0xff] %v342
  %367 = vst [vmem:[#allocation2 + $0x30] sm:$0xff] %v343
  %368 = vst [vmem:[#allocation2 + $0x38] sm:$0xff] %v344
  %369 = vst [vmem:[#allocation2 + $0x40] sm:$0xff] %v345
  %370 = vst [vmem:[#allocation2 + $0x48] sm:$0xff] %v346
  %371 = vst [vmem:[#allocation2 + $0x50] sm:$0xff] %v347
  %372 = vst [vmem:[#allocation2 + $0x58] sm:$0xff] %v348
  %373 = vst [vmem:[#allocation2 + $0x60] sm:$0xff] %v349
  %374 = vst [vmem:[#allocation2 + $0x68] sm:$0xff] %v350
  %375 = vst [vmem:[#allocation2 + $0x70] sm:$0xff] %v351
  %376 = vst [vmem:[#allocation2 + $0x78] sm:$0xff] %v352
  %377 = vst [vmem:[#allocation2 + $0x80] sm:$0xff] %v353
  %378 = vst [vmem:[#allocation2 + $0x88] sm:$0xff] %v354
  %379 = vst [vmem:[#allocation2 + $0x90] sm:$0xff] %v355
  %380 = vst [vmem:[#allocation2 + $0x98] sm:$0xff] %v356
  %381 = vst [vmem:[#allocation2 + $0xa0] sm:$0xff] %v357
  %382 = vst [vmem:[#allocation2 + $0xa8] sm:$0xff] %v358
  %383 = vst [vmem:[#allocation2 + $0xb0] sm:$0xff] %v359
  %384 = vst [vmem:[#allocation2 + $0xb8] sm:$0xff] %v360
  %v385 = vld [vmem:[%s6] sm:$0xff]
  %v386 = vld [vmem:[%s6 + $0x8] sm:$0xff]
  %v387 = vld [vmem:[%s6 + $0x10] sm:$0xff]
  %v388 = vld [vmem:[%s6 + $0x18] sm:$0xff]
  %v389 = vld [vmem:[%s6 + $0x20] sm:$0xff]
  %v390 = vld [vmem:[%s6 + $0x28] sm:$0xff]
  %v391 = vld [vmem:[%s6 + $0x30] sm:$0xff]
  %v392 = vld [vmem:[%s6 + $0x38] sm:$0xff]
  %v393 = vld [vmem:[%s6 + $0x40] sm:$0xff]
  %v394 = vld [vmem:[%s6 + $0x48] sm:$0xff]
  %v395 = vld [vmem:[%s6 + $0x50] sm:$0xff]
  %v396 = vld [vmem:[%s6 + $0x58] sm:$0xff]
  %v397 = vld [vmem:[%s6 + $0x60] sm:$0xff]
  %v398 = vld [vmem:[%s6 + $0x68] sm:$0xff]
  %v399 = vld [vmem:[%s6 + $0x70] sm:$0xff]
  %v400 = vld [vmem:[%s6 + $0x78] sm:$0xff]
  %v401 = vld [vmem:[%s1] sm:$0xff]
  %v402 = vld [vmem:[%s2] sm:$0xff]
  %v403 = vlaneseq
  %v404 = vand.u32 %v403, 127
  %v405 = vld [vmem:[#allocation2] sm:$0xff]
  %v406 = vld [vmem:[#allocation2 + $0x8] sm:$0xff]
  %vm407 = vcmask 523264
  %v409 = vsel %vm407, %v401, 0
  %411 = vmatprep.subr.mxu0 %v386
  %412 = vmatpush1.msra.mxu0 %v385
  %413 = vmatprep.subr.mxu0 %v388
  %414 = vmatpush1.msra.mxu0 %v387
  %415 = vmatprep.subr.mxu0 %v390
  %416 = vmatpush1.msra.mxu0 %v389
  %417 = vmatprep.subr.mxu0 %v392
  %418 = vmatpush1.msra.mxu0 %v391
  %419 = vmatprep.subr.mxu0 %v394
  %420 = vmatpush1.msra.mxu0 %v393
  %421 = vmatprep.subr.mxu0 %v396
  %422 = vmatpush1.msra.mxu0 %v395
  %423 = vmatprep.subr.mxu0 %v398
  %424 = vmatpush1.msra.mxu0 %v397
  %425 = vmatprep.subr.mxu0 %v400
  %426 = vmatpush1.msra.mxu0 %v399
  %427 = vmatprep.subr.mxu0 0.0
  %428 = vmatpush1.msra.mxu0 0.0
  %429 = vmatprep.subr.mxu0 0.0
  %430 = vmatpush1.msra.mxu0 0.0
  %431 = vmatprep.subr.mxu0 0.0
  %432 = vmatpush1.msra.mxu0 0.0
  %433 = vmatprep.subr.mxu0 0.0
  %434 = vmatpush1.msra.mxu0 0.0
  %435 = vmatprep.subr.mxu0 0.0
  %436 = vmatpush1.msra.mxu0 0.0
  %437 = vmatprep.subr.mxu0 0.0
  %438 = vmatpush1.msra.mxu0 0.0
  %439 = vmatprep.subr.mxu0 0.0
  %440 = vmatpush1.msra.mxu0 0.0
  %441 = vmatprep.subr.mxu0 0.0
  %442 = vmatpush1.msra.mxu0 0.0
  %443 = vmatprep.subr.mxu0 0.0
  %444 = vmatpush1.msra.mxu0 0.0
  %445 = vmatprep.subr.mxu0 0.0
  %446 = vmatpush1.msra.mxu0 0.0
  %447 = vmatprep.subr.mxu0 0.0
  %448 = vmatpush1.msra.mxu0 0.0
  %449 = vmatprep.subr.mxu0 0.0
  %450 = vmatpush1.msra.mxu0 0.0
  %451 = vmatprep.subr.mxu0 0.0
  %452 = vmatpush1.msra.mxu0 0.0
  %453 = vmatprep.subr.mxu0 0.0
  %454 = vmatpush1.msra.mxu0 0.0
  %455 = vmatprep.subr.mxu0 0.0
  %456 = vmatpush1.msra.mxu0 0.0
  %457 = vmatprep.subr.mxu0 0.0
  %458 = vmatpush1.msra.mxu0 0.0
  %459 = vmatprep.subr.mxu0 0.0
  %460 = vmatpush1.msra.mxu0 0.0
  %461 = vmatprep.subr.mxu0 0.0
  %462 = vmatpush1.msra.mxu0 0.0
  %463 = vmatprep.subr.mxu0 0.0
  %464 = vmatpush1.msra.mxu0 0.0
  %465 = vmatprep.subr.mxu0 0.0
  %466 = vmatpush1.msra.mxu0 0.0
  %467 = vmatprep.subr.mxu0 0.0
  %468 = vmatpush1.msra.mxu0 0.0
  %469 = vmatprep.subr.mxu0 0.0
  %470 = vmatpush1.msra.mxu0 0.0
  %471 = vmatprep.subr.mxu0 0.0
  %472 = vmatpush1.msra.mxu0 0.0
  %473 = vmatprep.subr.mxu0 0.0
  %474 = vmatpush1.msra.mxu0 0.0
  %475 = vmatprep.mubr.f32.mxu0 0.0
  %476 = vmatmul.mubr.f32.gmra.mrb[0].mxu0 %v409
  %v477 = vpop.f32.mrb[0].mxu0
  %v478 = vadd.f32 %v405, %v477
  %v479 = vpop.f32.mrb[0].mxu0
  %v480 = vadd.f32 %v406, %v479
  %481 = vdwg.mxu0
  %v482 = vxor.u32 %v478, 2147483648
  %v483 = vmul.f32 %v482, 1.442695
  %v484 = vpow.pop %v483
  %v485 = vadd.f32 %v484, 1.0
  %v486 = vrcp.pop %v485
  %v487 = vmul.f32 1.0, %v486
  %v488 = vtanh.pop %v480
  %v489 = vxor.u32 %v480, 2147483648
  %v490 = vmul.f32 %v489, 1.442695
  %v491 = vpow.pop %v490
  %v492 = vadd.f32 %v491, 1.0
  %v493 = vrcp.pop %v492
  %v494 = vmul.f32 1.0, %v493
  %496 = vrot.lane.b32.xlu0 %v402, 64
  %v497 = vpop.permute.xlu0 %496
  %v499 = vmul.f32 %v487, %v497
  %v500 = vmul.f32 %v487, %v488
  %502 = vrot.lane.b32.xlu0 %v500, 64
  %v503 = vpop.permute.xlu0 %502
  %v505 = vadd.f32 %v499, %v503
  %v506 = vtanh.pop %v505
  %v507 = vmul.f32 %v494, %v506
  %vm508 = vcmp.ge.s32.totalorder %v404, 0
  %vm509 = vcmp.lt.s32.totalorder %v404, 32
  %vm510 = vmand %vm508, %vm509
  %512 = vrot.lane.b32.xlu0 %v505, 64
  %v513 = vpop.permute.xlu0 %512
  %v515 = vsel %vm510, %v513, %v402
  %517 = vrot.lane.b32.xlu0 %v507, 64
  %v518 = vpop.permute.xlu0 %517
  %v520 = vsel %vm510, %v518, %v401
  %s521 = scalar_lea.vmem [#allocation2], 16
  %v522 = vld [vmem:[%s521] sm:$0xff]
  %v523 = vld [vmem:[%s521 + $0x8] sm:$0xff]
  %v525 = vsel %vm407, %v520, 0
  %527 = vmatprep.subr.mxu0 %v386
  %528 = vmatpush1.msra.mxu0 %v385
  %529 = vmatprep.subr.mxu0 %v388
  %530 = vmatpush1.msra.mxu0 %v387
  %531 = vmatprep.subr.mxu0 %v390
  %532 = vmatpush1.msra.mxu0 %v389
  %533 = vmatprep.subr.mxu0 %v392
  %534 = vmatpush1.msra.mxu0 %v391
  %535 = vmatprep.subr.mxu0 %v394
  %536 = vmatpush1.msra.mxu0 %v393
  %537 = vmatprep.subr.mxu0 %v396
  %538 = vmatpush1.msra.mxu0 %v395
  %539 = vmatprep.subr.mxu0 %v398
  %540 = vmatpush1.msra.mxu0 %v397
  %541 = vmatprep.subr.mxu0 %v400
  %542 = vmatpush1.msra.mxu0 %v399
  %543 = vmatprep.subr.mxu0 0.0
  %544 = vmatpush1.msra.mxu0 0.0
  %545 = vmatprep.subr.mxu0 0.0
  %546 = vmatpush1.msra.mxu0 0.0
  %547 = vmatprep.subr.mxu0 0.0
  %548 = vmatpush1.msra.mxu0 0.0
  %549 = vmatprep.subr.mxu0 0.0
  %550 = vmatpush1.msra.mxu0 0.0
  %551 = vmatprep.subr.mxu0 0.0
  %552 = vmatpush1.msra.mxu0 0.0
  %553 = vmatprep.subr.mxu0 0.0
  %554 = vmatpush1.msra.mxu0 0.0
  %555 = vmatprep.subr.mxu0 0.0
  %556 = vmatpush1.msra.mxu0 0.0
  %557 = vmatprep.subr.mxu0 0.0
  %558 = vmatpush1.msra.mxu0 0.0
  %559 = vmatprep.subr.mxu0 0.0
  %560 = vmatpush1.msra.mxu0 0.0
  %561 = vmatprep.subr.mxu0 0.0
  %562 = vmatpush1.msra.mxu0 0.0
  %563 = vmatprep.subr.mxu0 0.0
  %564 = vmatpush1.msra.mxu0 0.0
  %565 = vmatprep.subr.mxu0 0.0
  %566 = vmatpush1.msra.mxu0 0.0
  %567 = vmatprep.subr.mxu0 0.0
  %568 = vmatpush1.msra.mxu0 0.0
  %569 = vmatprep.subr.mxu0 0.0
  %570 = vmatpush1.msra.mxu0 0.0
  %571 = vmatprep.subr.mxu0 0.0
  %572 = vmatpush1.msra.mxu0 0.0
  %573 = vmatprep.subr.mxu0 0.0
  %574 = vmatpush1.msra.mxu0 0.0
  %575 = vmatprep.subr.mxu0 0.0
  %576 = vmatpush1.msra.mxu0 0.0
  %577 = vmatprep.subr.mxu0 0.0
  %578 = vmatpush1.msra.mxu0 0.0
  %579 = vmatprep.subr.mxu0 0.0
  %580 = vmatpush1.msra.mxu0 0.0
  %581 = vmatprep.subr.mxu0 0.0
  %582 = vmatpush1.msra.mxu0 0.0
  %583 = vmatprep.subr.mxu0 0.0
  %584 = vmatpush1.msra.mxu0 0.0
  %585 = vmatprep.subr.mxu0 0.0
  %586 = vmatpush1.msra.mxu0 0.0
  %587 = vmatprep.subr.mxu0 0.0
  %588 = vmatpush1.msra.mxu0 0.0
  %589 = vmatprep.subr.mxu0 0.0
  %590 = vmatpush1.msra.mxu0 0.0
  %591 = vmatprep.mubr.f32.mxu0 0.0
  %592 = vmatmul.mubr.f32.gmra.mrb[0].mxu0 %v525
  %v593 = vpop.f32.mrb[0].mxu0
  %v594 = vadd.f32 %v522, %v593
  %v595 = vpop.f32.mrb[0].mxu0
  %v596 = vadd.f32 %v523, %v595
  %597 = vdwg.mxu0
  %v598 = vxor.u32 %v594, 2147483648
  %v599 = vmul.f32 %v598, 1.442695
  %v600 = vpow.pop %v599
  %v601 = vadd.f32 %v600, 1.0
  %v602 = vrcp.pop %v601
  %v603 = vmul.f32 1.0, %v602
  %v604 = vtanh.pop %v596
  %v605 = vxor.u32 %v596, 2147483648
  %v606 = vmul.f32 %v605, 1.442695
  %v607 = vpow.pop %v606
  %v608 = vadd.f32 %v607, 1.0
  %v609 = vrcp.pop %v608
  %v610 = vmul.f32 1.0, %v609
  %612 = vrot.lane.b32.xlu0 %v515, 64
  %v613 = vpop.permute.xlu0 %612
  %v615 = vmul.f32 %v603, %v613
  %v616 = vmul.f32 %v603, %v604
  %618 = vrot.lane.b32.xlu0 %v616, 64
  %v619 = vpop.permute.xlu0 %618
  %v621 = vadd.f32 %v615, %v619
  %v622 = vtanh.pop %v621
  %v623 = vmul.f32 %v610, %v622
  %s624 = scalar_lea.vmem [#allocation2], 32
  %v625 = vld [vmem:[%s624] sm:$0xff]
  %v626 = vld [vmem:[%s624 + $0x8] sm:$0xff]
  %628 = vrot.lane.b32.xlu0 %v623, 64
  %v629 = vpop.permute.xlu0 %628
  %v630 = vsel %vm407, %v629, 0
  %632 = vmatprep.subr.mxu0 %v386
  %633 = vmatpush1.msra.mxu0 %v385
  %634 = vmatprep.subr.mxu0 %v388
  %635 = vmatpush1.msra.mxu0 %v387
  %636 = vmatprep.subr.mxu0 %v390
  %637 = vmatpush1.msra.mxu0 %v389
  %638 = vmatprep.subr.mxu0 %v392
  %639 = vmatpush1.msra.mxu0 %v391
  %640 = vmatprep.subr.mxu0 %v394
  %641 = vmatpush1.msra.mxu0 %v393
  %642 = vmatprep.subr.mxu0 %v396
  %643 = vmatpush1.msra.mxu0 %v395
  %644 = vmatprep.subr.mxu0 %v398
  %645 = vmatpush1.msra.mxu0 %v397
  %646 = vmatprep.subr.mxu0 %v400
  %647 = vmatpush1.msra.mxu0 %v399
  %648 = vmatprep.subr.mxu0 0.0
  %649 = vmatpush1.msra.mxu0 0.0
  %650 = vmatprep.subr.mxu0 0.0
  %651 = vmatpush1.msra.mxu0 0.0
  %652 = vmatprep.subr.mxu0 0.0
  %653 = vmatpush1.msra.mxu0 0.0
  %654 = vmatprep.subr.mxu0 0.0
  %655 = vmatpush1.msra.mxu0 0.0
  %656 = vmatprep.subr.mxu0 0.0
  %657 = vmatpush1.msra.mxu0 0.0
  %658 = vmatprep.subr.mxu0 0.0
  %659 = vmatpush1.msra.mxu0 0.0
  %660 = vmatprep.subr.mxu0 0.0
  %661 = vmatpush1.msra.mxu0 0.0
  %662 = vmatprep.subr.mxu0 0.0
  %663 = vmatpush1.msra.mxu0 0.0
  %664 = vmatprep.subr.mxu0 0.0
  %665 = vmatpush1.msra.mxu0 0.0
  %666 = vmatprep.subr.mxu0 0.0
  %667 = vmatpush1.msra.mxu0 0.0
  %668 = vmatprep.subr.mxu0 0.0
  %669 = vmatpush1.msra.mxu0 0.0
  %670 = vmatprep.subr.mxu0 0.0
  %671 = vmatpush1.msra.mxu0 0.0
  %672 = vmatprep.subr.mxu0 0.0
  %673 = vmatpush1.msra.mxu0 0.0
  %674 = vmatprep.subr.mxu0 0.0
  %675 = vmatpush1.msra.mxu0 0.0
  %676 = vmatprep.subr.mxu0 0.0
  %677 = vmatpush1.msra.mxu0 0.0
  %678 = vmatprep.subr.mxu0 0.0
  %679 = vmatpush1.msra.mxu0 0.0
  %680 = vmatprep.subr.mxu0 0.0
  %681 = vmatpush1.msra.mxu0 0.0
  %682 = vmatprep.subr.mxu0 0.0
  %683 = vmatpush1.msra.mxu0 0.0
  %684 = vmatprep.subr.mxu0 0.0
  %685 = vmatpush1.msra.mxu0 0.0
  %686 = vmatprep.subr.mxu0 0.0
  %687 = vmatpush1.msra.mxu0 0.0
  %688 = vmatprep.subr.mxu0 0.0
  %689 = vmatpush1.msra.mxu0 0.0
  %690 = vmatprep.subr.mxu0 0.0
  %691 = vmatpush1.msra.mxu0 0.0
  %692 = vmatprep.subr.mxu0 0.0
  %693 = vmatpush1.msra.mxu0 0.0
  %694 = vmatprep.subr.mxu0 0.0
  %695 = vmatpush1.msra.mxu0 0.0
  %696 = vmatprep.mubr.f32.mxu0 0.0
  %697 = vmatmul.mubr.f32.gmra.mrb[0].mxu0 %v630
  %v698 = vpop.f32.mrb[0].mxu0
  %v699 = vadd.f32 %v625, %v698
  %v700 = vpop.f32.mrb[0].mxu0
  %v701 = vadd.f32 %v626, %v700
  %702 = vdwg.mxu0
  %v703 = vxor.u32 %v699, 2147483648
  %v704 = vmul.f32 %v703, 1.442695
  %v705 = vpow.pop %v704
  %v706 = vadd.f32 %v705, 1.0
  %v707 = vrcp.pop %v706
  %v708 = vmul.f32 1.0, %v707
  %v709 = vtanh.pop %v701
  %v710 = vxor.u32 %v701, 2147483648
  %v711 = vmul.f32 %v710, 1.442695
  %v712 = vpow.pop %v711
  %v713 = vadd.f32 %v712, 1.0
  %v714 = vrcp.pop %v713
  %v715 = vmul.f32 1.0, %v714
  %v716 = vmul.f32 %v708, %v621
  %v717 = vmul.f32 %v708, %v709
  %719 = vrot.lane.b32.xlu0 %v717, 64
  %v720 = vpop.permute.xlu0 %719
  %v722 = vadd.f32 %v716, %v720
  %v723 = vtanh.pop %v722
  %v724 = vmul.f32 %v715, %v723
  %s725 = scalar_lea.vmem [#allocation2], 48
  %v726 = vld [vmem:[%s725] sm:$0xff]
  %v727 = vld [vmem:[%s725 + $0x8] sm:$0xff]
  %729 = vrot.lane.b32.xlu0 %v724, 64
  %v730 = vpop.permute.xlu0 %729
  %v731 = vsel %vm407, %v730, 0
  %733 = vmatprep.subr.mxu0 %v386
  %734 = vmatpush1.msra.mxu0 %v385
  %735 = vmatprep.subr.mxu0 %v388
  %736 = vmatpush1.msra.mxu0 %v387
  %737 = vmatprep.subr.mxu0 %v390
  %738 = vmatpush1.msra.mxu0 %v389
  %739 = vmatprep.subr.mxu0 %v392
  %740 = vmatpush1.msra.mxu0 %v391
  %741 = vmatprep.subr.mxu0 %v394
  %742 = vmatpush1.msra.mxu0 %v393
  %743 = vmatprep.subr.mxu0 %v396
  %744 = vmatpush1.msra.mxu0 %v395
  %745 = vmatprep.subr.mxu0 %v398
  %746 = vmatpush1.msra.mxu0 %v397
  %747 = vmatprep.subr.mxu0 %v400
  %748 = vmatpush1.msra.mxu0 %v399
  %749 = vmatprep.subr.mxu0 0.0
  %750 = vmatpush1.msra.mxu0 0.0
  %751 = vmatprep.subr.mxu0 0.0
  %752 = vmatpush1.msra.mxu0 0.0
  %753 = vmatprep.subr.mxu0 0.0
  %754 = vmatpush1.msra.mxu0 0.0
  %755 = vmatprep.subr.mxu0 0.0
  %756 = vmatpush1.msra.mxu0 0.0
  %757 = vmatprep.subr.mxu0 0.0
  %758 = vmatpush1.msra.mxu0 0.0
  %759 = vmatprep.subr.mxu0 0.0
  %760 = vmatpush1.msra.mxu0 0.0
  %761 = vmatprep.subr.mxu0 0.0
  %762 = vmatpush1.msra.mxu0 0.0
  %763 = vmatprep.subr.mxu0 0.0
  %764 = vmatpush1.msra.mxu0 0.0
  %765 = vmatprep.subr.mxu0 0.0
  %766 = vmatpush1.msra.mxu0 0.0
  %767 = vmatprep.subr.mxu0 0.0
  %768 = vmatpush1.msra.mxu0 0.0
  %769 = vmatprep.subr.mxu0 0.0
  %770 = vmatpush1.msra.mxu0 0.0
  %771 = vmatprep.subr.mxu0 0.0
  %772 = vmatpush1.msra.mxu0 0.0
  %773 = vmatprep.subr.mxu0 0.0
  %774 = vmatpush1.msra.mxu0 0.0
  %775 = vmatprep.subr.mxu0 0.0
  %776 = vmatpush1.msra.mxu0 0.0
  %777 = vmatprep.subr.mxu0 0.0
  %778 = vmatpush1.msra.mxu0 0.0
  %779 = vmatprep.subr.mxu0 0.0
  %780 = vmatpush1.msra.mxu0 0.0
  %781 = vmatprep.subr.mxu0 0.0
  %782 = vmatpush1.msra.mxu0 0.0
  %783 = vmatprep.subr.mxu0 0.0
  %784 = vmatpush1.msra.mxu0 0.0
  %785 = vmatprep.subr.mxu0 0.0
  %786 = vmatpush1.msra.mxu0 0.0
  %787 = vmatprep.subr.mxu0 0.0
  %788 = vmatpush1.msra.mxu0 0.0
  %789 = vmatprep.subr.mxu0 0.0
  %790 = vmatpush1.msra.mxu0 0.0
  %791 = vmatprep.subr.mxu0 0.0
  %792 = vmatpush1.msra.mxu0 0.0
  %793 = vmatprep.subr.mxu0 0.0
  %794 = vmatpush1.msra.mxu0 0.0
  %795 = vmatprep.subr.mxu0 0.0
  %796 = vmatpush1.msra.mxu0 0.0
  %797 = vmatprep.mubr.f32.mxu0 0.0
  %798 = vmatmul.mubr.f32.gmra.mrb[0].mxu0 %v731
  %v799 = vpop.f32.mrb[0].mxu0
  %v800 = vadd.f32 %v726, %v799
  %v801 = vpop.f32.mrb[0].mxu0
  %v802 = vadd.f32 %v727, %v801
  %803 = vdwg.mxu0
  %v804 = vxor.u32 %v800, 2147483648
  %v805 = vmul.f32 %v804, 1.442695
  %v806 = vpow.pop %v805
  %v807 = vadd.f32 %v806, 1.0
  %v808 = vrcp.pop %v807
  %v809 = vmul.f32 1.0, %v808
  %v810 = vtanh.pop %v802
  %v811 = vxor.u32 %v802, 2147483648
  %v812 = vmul.f32 %v811, 1.442695
  %v813 = vpow.pop %v812
  %v814 = vadd.f32 %v813, 1.0
  %v815 = vrcp.pop %v814
  %v816 = vmul.f32 1.0, %v815
  %v817 = vmul.f32 %v809, %v722
  %v818 = vmul.f32 %v809, %v810
  %820 = vrot.lane.b32.xlu0 %v818, 64
  %v821 = vpop.permute.xlu0 %820
  %v823 = vadd.f32 %v817, %v821
  %v824 = vtanh.pop %v823
  %v825 = vmul.f32 %v816, %v824
  %827 = vrot.lane.b32.xlu0 %v825, 64
  %v828 = vpop.permute.xlu0 %827
  %830 = vst.msk [vmem:[#allocation3] sm:$0xff] %vm407, %v828
  %s831 = scalar_lea.vmem [#allocation2], 64
  %v832 = vld [vmem:[%s831] sm:$0xff]
  %v833 = vld [vmem:[%s831 + $0x8] sm:$0xff]
  %v834 = vsel %vm407, %v828, 0
  %836 = vmatprep.subr.mxu0 %v386
  %837 = vmatpush1.msra.mxu0 %v385
  %838 = vmatprep.subr.mxu0 %v388
  %839 = vmatpush1.msra.mxu0 %v387
  %840 = vmatprep.subr.mxu0 %v390
  %841 = vmatpush1.msra.mxu0 %v389
  %842 = vmatprep.subr.mxu0 %v392
  %843 = vmatpush1.msra.mxu0 %v391
  %844 = vmatprep.subr.mxu0 %v394
  %845 = vmatpush1.msra.mxu0 %v393
  %846 = vmatprep.subr.mxu0 %v396
  %847 = vmatpush1.msra.mxu0 %v395
  %848 = vmatprep.subr.mxu0 %v398
  %849 = vmatpush1.msra.mxu0 %v397
  %850 = vmatprep.subr.mxu0 %v400
  %851 = vmatpush1.msra.mxu0 %v399
  %852 = vmatprep.subr.mxu0 0.0
  %853 = vmatpush1.msra.mxu0 0.0
  %854 = vmatprep.subr.mxu0 0.0
  %855 = vmatpush1.msra.mxu0 0.0
  %856 = vmatprep.subr.mxu0 0.0
  %857 = vmatpush1.msra.mxu0 0.0
  %858 = vmatprep.subr.mxu0 0.0
  %859 = vmatpush1.msra.mxu0 0.0
  %860 = vmatprep.subr.mxu0 0.0
  %861 = vmatpush1.msra.mxu0 0.0
  %862 = vmatprep.subr.mxu0 0.0
  %863 = vmatpush1.msra.mxu0 0.0
  %864 = vmatprep.subr.mxu0 0.0
  %865 = vmatpush1.msra.mxu0 0.0
  %866 = vmatprep.subr.mxu0 0.0
  %867 = vmatpush1.msra.mxu0 0.0
  %868 = vmatprep.subr.mxu0 0.0
  %869 = vmatpush1.msra.mxu0 0.0
  %870 = vmatprep.subr.mxu0 0.0
  %871 = vmatpush1.msra.mxu0 0.0
  %872 = vmatprep.subr.mxu0 0.0
  %873 = vmatpush1.msra.mxu0 0.0
  %874 = vmatprep.subr.mxu0 0.0
  %875 = vmatpush1.msra.mxu0 0.0
  %876 = vmatprep.subr.mxu0 0.0
  %877 = vmatpush1.msra.mxu0 0.0
  %878 = vmatprep.subr.mxu0 0.0
  %879 = vmatpush1.msra.mxu0 0.0
  %880 = vmatprep.subr.mxu0 0.0
  %881 = vmatpush1.msra.mxu0 0.0
  %882 = vmatprep.subr.mxu0 0.0
  %883 = vmatpush1.msra.mxu0 0.0
  %884 = vmatprep.subr.mxu0 0.0
  %885 = vmatpush1.msra.mxu0 0.0
  %886 = vmatprep.subr.mxu0 0.0
  %887 = vmatpush1.msra.mxu0 0.0
  %888 = vmatprep.subr.mxu0 0.0
  %889 = vmatpush1.msra.mxu0 0.0
  %890 = vmatprep.subr.mxu0 0.0
  %891 = vmatpush1.msra.mxu0 0.0
  %892 = vmatprep.subr.mxu0 0.0
  %893 = vmatpush1.msra.mxu0 0.0
  %894 = vmatprep.subr.mxu0 0.0
  %895 = vmatpush1.msra.mxu0 0.0
  %896 = vmatprep.subr.mxu0 0.0
  %897 = vmatpush1.msra.mxu0 0.0
  %898 = vmatprep.subr.mxu0 0.0
  %899 = vmatpush1.msra.mxu0 0.0
  %900 = vmatprep.mubr.f32.mxu0 0.0
  %901 = vmatmul.mubr.f32.gmra.mrb[0].mxu0 %v834
  %v902 = vpop.f32.mrb[0].mxu0
  %v903 = vadd.f32 %v832, %v902
  %v904 = vpop.f32.mrb[0].mxu0
  %v905 = vadd.f32 %v833, %v904
  %906 = vdwg.mxu0
  %v907 = vxor.u32 %v903, 2147483648
  %v908 = vmul.f32 %v907, 1.442695
  %v909 = vpow.pop %v908
  %v910 = vadd.f32 %v909, 1.0
  %v911 = vrcp.pop %v910
  %v912 = vmul.f32 1.0, %v911
  %v913 = vtanh.pop %v905
  %v914 = vxor.u32 %v905, 2147483648
  %v915 = vmul.f32 %v914, 1.442695
  %v916 = vpow.pop %v915
  %v917 = vadd.f32 %v916, 1.0
  %v918 = vrcp.pop %v917
  %v919 = vmul.f32 1.0, %v918
  %v920 = vmul.f32 %v912, %v823
  %v921 = vmul.f32 %v912, %v913
  %923 = vrot.lane.b32.xlu0 %v921, 64
  %v924 = vpop.permute.xlu0 %923
  %v926 = vadd.f32 %v920, %v924
  %v927 = vtanh.pop %v926
  %v928 = vmul.f32 %v919, %v927
  %930 = vrot.lane.b32.xlu0 %v928, 64
  %v931 = vpop.permute.xlu0 %930
  %933 = vst.msk [vmem:[#allocation3 + $0x8] sm:$0xff] %vm407, %v931
  %s934 = scalar_lea.vmem [#allocation2], 80
  %v935 = vld [vmem:[%s934] sm:$0xff]
  %v936 = vld [vmem:[%s934 + $0x8] sm:$0xff]
  %v937 = vsel %vm407, %v931, 0
  %939 = vmatprep.subr.mxu0 %v386
  %940 = vmatpush1.msra.mxu0 %v385
  %941 = vmatprep.subr.mxu0 %v388
  %942 = vmatpush1.msra.mxu0 %v387
  %943 = vmatprep.subr.mxu0 %v390
  %944 = vmatpush1.msra.mxu0 %v389
  %945 = vmatprep.subr.mxu0 %v392
  %946 = vmatpush1.msra.mxu0 %v391
  %947 = vmatprep.subr.mxu0 %v394
  %948 = vmatpush1.msra.mxu0 %v393
  %949 = vmatprep.subr.mxu0 %v396
  %950 = vmatpush1.msra.mxu0 %v395
  %951 = vmatprep.subr.mxu0 %v398
  %952 = vmatpush1.msra.mxu0 %v397
  %953 = vmatprep.subr.mxu0 %v400
  %954 = vmatpush1.msra.mxu0 %v399
  %955 = vmatprep.subr.mxu0 0.0
  %956 = vmatpush1.msra.mxu0 0.0
  %957 = vmatprep.subr.mxu0 0.0
  %958 = vmatpush1.msra.mxu0 0.0
  %959 = vmatprep.subr.mxu0 0.0
  %960 = vmatpush1.msra.mxu0 0.0
  %961 = vmatprep.subr.mxu0 0.0
  %962 = vmatpush1.msra.mxu0 0.0
  %963 = vmatprep.subr.mxu0 0.0
  %964 = vmatpush1.msra.mxu0 0.0
  %965 = vmatprep.subr.mxu0 0.0
  %966 = vmatpush1.msra.mxu0 0.0
  %967 = vmatprep.subr.mxu0 0.0
  %968 = vmatpush1.msra.mxu0 0.0
  %969 = vmatprep.subr.mxu0 0.0
  %970 = vmatpush1.msra.mxu0 0.0
  %971 = vmatprep.subr.mxu0 0.0
  %972 = vmatpush1.msra.mxu0 0.0
  %973 = vmatprep.subr.mxu0 0.0
  %974 = vmatpush1.msra.mxu0 0.0
  %975 = vmatprep.subr.mxu0 0.0
  %976 = vmatpush1.msra.mxu0 0.0
  %977 = vmatprep.subr.mxu0 0.0
  %978 = vmatpush1.msra.mxu0 0.0
  %979 = vmatprep.subr.mxu0 0.0
  %980 = vmatpush1.msra.mxu0 0.0
  %981 = vmatprep.subr.mxu0 0.0
  %982 = vmatpush1.msra.mxu0 0.0
  %983 = vmatprep.subr.mxu0 0.0
  %984 = vmatpush1.msra.mxu0 0.0
  %985 = vmatprep.subr.mxu0 0.0
  %986 = vmatpush1.msra.mxu0 0.0
  %987 = vmatprep.subr.mxu0 0.0
  %988 = vmatpush1.msra.mxu0 0.0
  %989 = vmatprep.subr.mxu0 0.0
  %990 = vmatpush1.msra.mxu0 0.0
  %991 = vmatprep.subr.mxu0 0.0
  %992 = vmatpush1.msra.mxu0 0.0
  %993 = vmatprep.subr.mxu0 0.0
  %994 = vmatpush1.msra.mxu0 0.0
  %995 = vmatprep.subr.mxu0 0.0
  %996 = vmatpush1.msra.mxu0 0.0
  %997 = vmatprep.subr.mxu0 0.0
  %998 = vmatpush1.msra.mxu0 0.0
  %999 = vmatprep.subr.mxu0 0.0
  %1000 = vmatpush1.msra.mxu0 0.0
  %1001 = vmatprep.subr.mxu0 0.0
  %1002 = vmatpush1.msra.mxu0 0.0
  %1003 = vmatprep.mubr.f32.mxu0 0.0
  %1004 = vmatmul.mubr.f32.gmra.mrb[0].mxu0 %v937
  %v1005 = vpop.f32.mrb[0].mxu0
  %v1006 = vadd.f32 %v935, %v1005
  %v1007 = vpop.f32.mrb[0].mxu0
  %v1008 = vadd.f32 %v936, %v1007
  %1009 = vdwg.mxu0
  %v1010 = vxor.u32 %v1006, 2147483648
  %v1011 = vmul.f32 %v1010, 1.442695
  %v1012 = vpow.pop %v1011
  %v1013 = vadd.f32 %v1012, 1.0
  %v1014 = vrcp.pop %v1013
  %v1015 = vmul.f32 1.0, %v1014
  %v1016 = vtanh.pop %v1008
  %v1017 = vxor.u32 %v1008, 2147483648
  %v1018 = vmul.f32 %v1017, 1.442695
  %v1019 = vpow.pop %v1018
  %v1020 = vadd.f32 %v1019, 1.0
  %v1021 = vrcp.pop %v1020
  %v1022 = vmul.f32 1.0, %v1021
  %v1023 = vmul.f32 %v1015, %v926
  %v1024 = vmul.f32 %v1015, %v1016
  %1026 = vrot.lane.b32.xlu0 %v1024, 64
  %v1027 = vpop.permute.xlu0 %1026
  %v1029 = vadd.f32 %v1023, %v1027
  %v1030 = vtanh.pop %v1029
  %v1031 = vmul.f32 %v1022, %v1030
  %1033 = vrot.lane.b32.xlu0 %v1031, 64
  %v1034 = vpop.permute.xlu0 %1033
  %1036 = vst.msk [vmem:[#allocation3 + $0x10] sm:$0xff] %vm407, %v1034
  %s1037 = scalar_lea.vmem [#allocation2], 96
  %v1038 = vld [vmem:[%s1037] sm:$0xff]
  %v1039 = vld [vmem:[%s1037 + $0x8] sm:$0xff]
  %v1040 = vsel %vm407, %v1034, 0
  %1042 = vmatprep.subr.mxu0 %v386
  %1043 = vmatpush1.msra.mxu0 %v385
  %1044 = vmatprep.subr.mxu0 %v388
  %1045 = vmatpush1.msra.mxu0 %v387
  %1046 = vmatprep.subr.mxu0 %v390
  %1047 = vmatpush1.msra.mxu0 %v389
  %1048 = vmatprep.subr.mxu0 %v392
  %1049 = vmatpush1.msra.mxu0 %v391
  %1050 = vmatprep.subr.mxu0 %v394
  %1051 = vmatpush1.msra.mxu0 %v393
  %1052 = vmatprep.subr.mxu0 %v396
  %1053 = vmatpush1.msra.mxu0 %v395
  %1054 = vmatprep.subr.mxu0 %v398
  %1055 = vmatpush1.msra.mxu0 %v397
  %1056 = vmatprep.subr.mxu0 %v400
  %1057 = vmatpush1.msra.mxu0 %v399
  %1058 = vmatprep.subr.mxu0 0.0
  %1059 = vmatpush1.msra.mxu0 0.0
  %1060 = vmatprep.subr.mxu0 0.0
  %1061 = vmatpush1.msra.mxu0 0.0
  %1062 = vmatprep.subr.mxu0 0.0
  %1063 = vmatpush1.msra.mxu0 0.0
  %1064 = vmatprep.subr.mxu0 0.0
  %1065 = vmatpush1.msra.mxu0 0.0
  %1066 = vmatprep.subr.mxu0 0.0
  %1067 = vmatpush1.msra.mxu0 0.0
  %1068 = vmatprep.subr.mxu0 0.0
  %1069 = vmatpush1.msra.mxu0 0.0
  %1070 = vmatprep.subr.mxu0 0.0
  %1071 = vmatpush1.msra.mxu0 0.0
  %1072 = vmatprep.subr.mxu0 0.0
  %1073 = vmatpush1.msra.mxu0 0.0
  %1074 = vmatprep.subr.mxu0 0.0
  %1075 = vmatpush1.msra.mxu0 0.0
  %1076 = vmatprep.subr.mxu0 0.0
  %1077 = vmatpush1.msra.mxu0 0.0
  %1078 = vmatprep.subr.mxu0 0.0
  %1079 = vmatpush1.msra.mxu0 0.0
  %1080 = vmatprep.subr.mxu0 0.0
  %1081 = vmatpush1.msra.mxu0 0.0
  %1082 = vmatprep.subr.mxu0 0.0
  %1083 = vmatpush1.msra.mxu0 0.0
  %1084 = vmatprep.subr.mxu0 0.0
  %1085 = vmatpush1.msra.mxu0 0.0
  %1086 = vmatprep.subr.mxu0 0.0
  %1087 = vmatpush1.msra.mxu0 0.0
  %1088 = vmatprep.subr.mxu0 0.0
  %1089 = vmatpush1.msra.mxu0 0.0
  %1090 = vmatprep.subr.mxu0 0.0
  %1091 = vmatpush1.msra.mxu0 0.0
  %1092 = vmatprep.subr.mxu0 0.0
  %1093 = vmatpush1.msra.mxu0 0.0
  %1094 = vmatprep.subr.mxu0 0.0
  %1095 = vmatpush1.msra.mxu0 0.0
  %1096 = vmatprep.subr.mxu0 0.0
  %1097 = vmatpush1.msra.mxu0 0.0
  %1098 = vmatprep.subr.mxu0 0.0
  %1099 = vmatpush1.msra.mxu0 0.0
  %1100 = vmatprep.subr.mxu0 0.0
  %1101 = vmatpush1.msra.mxu0 0.0
  %1102 = vmatprep.subr.mxu0 0.0
  %1103 = vmatpush1.msra.mxu0 0.0
  %1104 = vmatprep.subr.mxu0 0.0
  %1105 = vmatpush1.msra.mxu0 0.0
  %1106 = vmatprep.mubr.f32.mxu0 0.0
  %1107 = vmatmul.mubr.f32.gmra.mrb[0].mxu0 %v1040
  %v1108 = vpop.f32.mrb[0].mxu0
  %v1109 = vadd.f32 %v1038, %v1108
  %v1110 = vpop.f32.mrb[0].mxu0
  %v1111 = vadd.f32 %v1039, %v1110
  %1112 = vdwg.mxu0
  %v1113 = vxor.u32 %v1109, 2147483648
  %v1114 = vmul.f32 %v1113, 1.442695
  %v1115 = vpow.pop %v1114
  %v1116 = vadd.f32 %v1115, 1.0
  %v1117 = vrcp.pop %v1116
  %v1118 = vmul.f32 1.0, %v1117
  %v1119 = vtanh.pop %v1111
  %v1120 = vxor.u32 %v1111, 2147483648
  %v1121 = vmul.f32 %v1120, 1.442695
  %v1122 = vpow.pop %v1121
  %v1123 = vadd.f32 %v1122, 1.0
  %v1124 = vrcp.pop %v1123
  %v1125 = vmul.f32 1.0, %v1124
  %v1126 = vmul.f32 %v1118, %v1029
  %v1127 = vmul.f32 %v1118, %v1119
  %1129 = vrot.lane.b32.xlu0 %v1127, 64
  %v1130 = vpop.permute.xlu0 %1129
  %v1132 = vadd.f32 %v1126, %v1130
  %v1133 = vtanh.pop %v1132
  %v1134 = vmul.f32 %v1125, %v1133
  %1136 = vrot.lane.b32.xlu0 %v1134, 64
  %v1137 = vpop.permute.xlu0 %1136
  %1139 = vst.msk [vmem:[#allocation3 + $0x18] sm:$0xff] %vm407, %v1137
  %s1140 = scalar_lea.vmem [#allocation2], 112
  %v1141 = vld [vmem:[%s1140] sm:$0xff]
  %v1142 = vld [vmem:[%s1140 + $0x8] sm:$0xff]
  %v1143 = vsel %vm407, %v1137, 0
  %1145 = vmatprep.subr.mxu0 %v386
  %1146 = vmatpush1.msra.mxu0 %v385
  %1147 = vmatprep.subr.mxu0 %v388
  %1148 = vmatpush1.msra.mxu0 %v387
  %1149 = vmatprep.subr.mxu0 %v390
  %1150 = vmatpush1.msra.mxu0 %v389
  %1151 = vmatprep.subr.mxu0 %v392
  %1152 = vmatpush1.msra.mxu0 %v391
  %1153 = vmatprep.subr.mxu0 %v394
  %1154 = vmatpush1.msra.mxu0 %v393
  %1155 = vmatprep.subr.mxu0 %v396
  %1156 = vmatpush1.msra.mxu0 %v395
  %1157 = vmatprep.subr.mxu0 %v398
  %1158 = vmatpush1.msra.mxu0 %v397
  %1159 = vmatprep.subr.mxu0 %v400
  %1160 = vmatpush1.msra.mxu0 %v399
  %1161 = vmatprep.subr.mxu0 0.0
  %1162 = vmatpush1.msra.mxu0 0.0
  %1163 = vmatprep.subr.mxu0 0.0
  %1164 = vmatpush1.msra.mxu0 0.0
  %1165 = vmatprep.subr.mxu0 0.0
  %1166 = vmatpush1.msra.mxu0 0.0
  %1167 = vmatprep.subr.mxu0 0.0
  %1168 = vmatpush1.msra.mxu0 0.0
  %1169 = vmatprep.subr.mxu0 0.0
  %1170 = vmatpush1.msra.mxu0 0.0
  %1171 = vmatprep.subr.mxu0 0.0
  %1172 = vmatpush1.msra.mxu0 0.0
  %1173 = vmatprep.subr.mxu0 0.0
  %1174 = vmatpush1.msra.mxu0 0.0
  %1175 = vmatprep.subr.mxu0 0.0
  %1176 = vmatpush1.msra.mxu0 0.0
  %1177 = vmatprep.subr.mxu0 0.0
  %1178 = vmatpush1.msra.mxu0 0.0
  %1179 = vmatprep.subr.mxu0 0.0
  %1180 = vmatpush1.msra.mxu0 0.0
  %1181 = vmatprep.subr.mxu0 0.0
  %1182 = vmatpush1.msra.mxu0 0.0
  %1183 = vmatprep.subr.mxu0 0.0
  %1184 = vmatpush1.msra.mxu0 0.0
  %1185 = vmatprep.subr.mxu0 0.0
  %1186 = vmatpush1.msra.mxu0 0.0
  %1187 = vmatprep.subr.mxu0 0.0
  %1188 = vmatpush1.msra.mxu0 0.0
  %1189 = vmatprep.subr.mxu0 0.0
  %1190 = vmatpush1.msra.mxu0 0.0
  %1191 = vmatprep.subr.mxu0 0.0
  %1192 = vmatpush1.msra.mxu0 0.0
  %1193 = vmatprep.subr.mxu0 0.0
  %1194 = vmatpush1.msra.mxu0 0.0
  %1195 = vmatprep.subr.mxu0 0.0
  %1196 = vmatpush1.msra.mxu0 0.0
  %1197 = vmatprep.subr.mxu0 0.0
  %1198 = vmatpush1.msra.mxu0 0.0
  %1199 = vmatprep.subr.mxu0 0.0
  %1200 = vmatpush1.msra.mxu0 0.0
  %1201 = vmatprep.subr.mxu0 0.0
  %1202 = vmatpush1.msra.mxu0 0.0
  %1203 = vmatprep.subr.mxu0 0.0
  %1204 = vmatpush1.msra.mxu0 0.0
  %1205 = vmatprep.subr.mxu0 0.0
  %1206 = vmatpush1.msra.mxu0 0.0
  %1207 = vmatprep.subr.mxu0 0.0
  %1208 = vmatpush1.msra.mxu0 0.0
  %1209 = vmatprep.mubr.f32.mxu0 0.0
  %1210 = vmatmul.mubr.f32.gmra.mrb[0].mxu0 %v1143
  %v1211 = vpop.f32.mrb[0].mxu0
  %v1212 = vadd.f32 %v1141, %v1211
  %v1213 = vpop.f32.mrb[0].mxu0
  %v1214 = vadd.f32 %v1142, %v1213
  %1215 = vdwg.mxu0
  %v1216 = vxor.u32 %v1212, 2147483648
  %v1217 = vmul.f32 %v1216, 1.442695
  %v1218 = vpow.pop %v1217
  %v1219 = vadd.f32 %v1218, 1.0
  %v1220 = vrcp.pop %v1219
  %v1221 = vmul.f32 1.0, %v1220
  %v1222 = vtanh.pop %v1214
  %v1223 = vxor.u32 %v1214, 2147483648
  %v1224 = vmul.f32 %v1223, 1.442695
  %v1225 = vpow.pop %v1224
  %v1226 = vadd.f32 %v1225, 1.0
  %v1227 = vrcp.pop %v1226
  %v1228 = vmul.f32 1.0, %v1227
  %v1229 = vmul.f32 %v1221, %v1132
  %v1230 = vmul.f32 %v1221, %v1222
  %1232 = vrot.lane.b32.xlu0 %v1230, 64
  %v1233 = vpop.permute.xlu0 %1232
  %v1235 = vadd.f32 %v1229, %v1233
  %v1236 = vtanh.pop %v1235
  %v1237 = vmul.f32 %v1228, %v1236
  %1239 = vrot.lane.b32.xlu0 %v1237, 64
  %v1240 = vpop.permute.xlu0 %1239
  %1242 = vst.msk [vmem:[#allocation3 + $0x20] sm:$0xff] %vm407, %v1240
  %s1243 = scalar_lea.vmem [#allocation2], 128
  %v1244 = vld [vmem:[%s1243] sm:$0xff]
  %v1245 = vld [vmem:[%s1243 + $0x8] sm:$0xff]
  %v1246 = vsel %vm407, %v1240, 0
  %1248 = vmatprep.subr.mxu0 %v386
  %1249 = vmatpush1.msra.mxu0 %v385
  %1250 = vmatprep.subr.mxu0 %v388
  %1251 = vmatpush1.msra.mxu0 %v387
  %1252 = vmatprep.subr.mxu0 %v390
  %1253 = vmatpush1.msra.mxu0 %v389
  %1254 = vmatprep.subr.mxu0 %v392
  %1255 = vmatpush1.msra.mxu0 %v391
  %1256 = vmatprep.subr.mxu0 %v394
  %1257 = vmatpush1.msra.mxu0 %v393
  %1258 = vmatprep.subr.mxu0 %v396
  %1259 = vmatpush1.msra.mxu0 %v395
  %1260 = vmatprep.subr.mxu0 %v398
  %1261 = vmatpush1.msra.mxu0 %v397
  %1262 = vmatprep.subr.mxu0 %v400
  %1263 = vmatpush1.msra.mxu0 %v399
  %1264 = vmatprep.subr.mxu0 0.0
  %1265 = vmatpush1.msra.mxu0 0.0
  %1266 = vmatprep.subr.mxu0 0.0
  %1267 = vmatpush1.msra.mxu0 0.0
  %1268 = vmatprep.subr.mxu0 0.0
  %1269 = vmatpush1.msra.mxu0 0.0
  %1270 = vmatprep.subr.mxu0 0.0
  %1271 = vmatpush1.msra.mxu0 0.0
  %1272 = vmatprep.subr.mxu0 0.0
  %1273 = vmatpush1.msra.mxu0 0.0
  %1274 = vmatprep.subr.mxu0 0.0
  %1275 = vmatpush1.msra.mxu0 0.0
  %1276 = vmatprep.subr.mxu0 0.0
  %1277 = vmatpush1.msra.mxu0 0.0
  %1278 = vmatprep.subr.mxu0 0.0
  %1279 = vmatpush1.msra.mxu0 0.0
  %1280 = vmatprep.subr.mxu0 0.0
  %1281 = vmatpush1.msra.mxu0 0.0
  %1282 = vmatprep.subr.mxu0 0.0
  %1283 = vmatpush1.msra.mxu0 0.0
  %1284 = vmatprep.subr.mxu0 0.0
  %1285 = vmatpush1.msra.mxu0 0.0
  %1286 = vmatprep.subr.mxu0 0.0
  %1287 = vmatpush1.msra.mxu0 0.0
  %1288 = vmatprep.subr.mxu0 0.0
  %1289 = vmatpush1.msra.mxu0 0.0
  %1290 = vmatprep.subr.mxu0 0.0
  %1291 = vmatpush1.msra.mxu0 0.0
  %1292 = vmatprep.subr.mxu0 0.0
  %1293 = vmatpush1.msra.mxu0 0.0
  %1294 = vmatprep.subr.mxu0 0.0
  %1295 = vmatpush1.msra.mxu0 0.0
  %1296 = vmatprep.subr.mxu0 0.0
  %1297 = vmatpush1.msra.mxu0 0.0
  %1298 = vmatprep.subr.mxu0 0.0
  %1299 = vmatpush1.msra.mxu0 0.0
  %1300 = vmatprep.subr.mxu0 0.0
  %1301 = vmatpush1.msra.mxu0 0.0
  %1302 = vmatprep.subr.mxu0 0.0
  %1303 = vmatpush1.msra.mxu0 0.0
  %1304 = vmatprep.subr.mxu0 0.0
  %1305 = vmatpush1.msra.mxu0 0.0
  %1306 = vmatprep.subr.mxu0 0.0
  %1307 = vmatpush1.msra.mxu0 0.0
  %1308 = vmatprep.subr.mxu0 0.0
  %1309 = vmatpush1.msra.mxu0 0.0
  %1310 = vmatprep.subr.mxu0 0.0
  %1311 = vmatpush1.msra.mxu0 0.0
  %1312 = vmatprep.mubr.f32.mxu0 0.0
  %1313 = vmatmul.mubr.f32.gmra.mrb[0].mxu0 %v1246
  %v1314 = vpop.f32.mrb[0].mxu0
  %v1315 = vadd.f32 %v1244, %v1314
  %v1316 = vpop.f32.mrb[0].mxu0
  %v1317 = vadd.f32 %v1245, %v1316
  %1318 = vdwg.mxu0
  %v1319 = vxor.u32 %v1315, 2147483648
  %v1320 = vmul.f32 %v1319, 1.442695
  %v1321 = vpow.pop %v1320
  %v1322 = vadd.f32 %v1321, 1.0
  %v1323 = vrcp.pop %v1322
  %v1324 = vmul.f32 1.0, %v1323
  %v1325 = vtanh.pop %v1317
  %v1326 = vxor.u32 %v1317, 2147483648
  %v1327 = vmul.f32 %v1326, 1.442695
  %v1328 = vpow.pop %v1327
  %v1329 = vadd.f32 %v1328, 1.0
  %v1330 = vrcp.pop %v1329
  %v1331 = vmul.f32 1.0, %v1330
  %v1332 = vmul.f32 %v1324, %v1235
  %v1333 = vmul.f32 %v1324, %v1325
  %1335 = vrot.lane.b32.xlu0 %v1333, 64
  %v1336 = vpop.permute.xlu0 %1335
  %v1338 = vadd.f32 %v1332, %v1336
  %v1339 = vtanh.pop %v1338
  %v1340 = vmul.f32 %v1331, %v1339
  %1342 = vrot.lane.b32.xlu0 %v1340, 64
  %v1343 = vpop.permute.xlu0 %1342
  %1345 = vst.msk [vmem:[#allocation3 + $0x28] sm:$0xff] %vm407, %v1343
  %s1346 = scalar_lea.vmem [#allocation2], 144
  %v1347 = vld [vmem:[%s1346] sm:$0xff]
  %v1348 = vld [vmem:[%s1346 + $0x8] sm:$0xff]
  %v1349 = vsel %vm407, %v1343, 0
  %1351 = vmatprep.subr.mxu0 %v386
  %1352 = vmatpush1.msra.mxu0 %v385
  %1353 = vmatprep.subr.mxu0 %v388
  %1354 = vmatpush1.msra.mxu0 %v387
  %1355 = vmatprep.subr.mxu0 %v390
  %1356 = vmatpush1.msra.mxu0 %v389
  %1357 = vmatprep.subr.mxu0 %v392
  %1358 = vmatpush1.msra.mxu0 %v391
  %1359 = vmatprep.subr.mxu0 %v394
  %1360 = vmatpush1.msra.mxu0 %v393
  %1361 = vmatprep.subr.mxu0 %v396
  %1362 = vmatpush1.msra.mxu0 %v395
  %1363 = vmatprep.subr.mxu0 %v398
  %1364 = vmatpush1.msra.mxu0 %v397
  %1365 = vmatprep.subr.mxu0 %v400
  %1366 = vmatpush1.msra.mxu0 %v399
  %1367 = vmatprep.subr.mxu0 0.0
  %1368 = vmatpush1.msra.mxu0 0.0
  %1369 = vmatprep.subr.mxu0 0.0
  %1370 = vmatpush1.msra.mxu0 0.0
  %1371 = vmatprep.subr.mxu0 0.0
  %1372 = vmatpush1.msra.mxu0 0.0
  %1373 = vmatprep.subr.mxu0 0.0
  %1374 = vmatpush1.msra.mxu0 0.0
  %1375 = vmatprep.subr.mxu0 0.0
  %1376 = vmatpush1.msra.mxu0 0.0
  %1377 = vmatprep.subr.mxu0 0.0
  %1378 = vmatpush1.msra.mxu0 0.0
  %1379 = vmatprep.subr.mxu0 0.0
  %1380 = vmatpush1.msra.mxu0 0.0
  %1381 = vmatprep.subr.mxu0 0.0
  %1382 = vmatpush1.msra.mxu0 0.0
  %1383 = vmatprep.subr.mxu0 0.0
  %1384 = vmatpush1.msra.mxu0 0.0
  %1385 = vmatprep.subr.mxu0 0.0
  %1386 = vmatpush1.msra.mxu0 0.0
  %1387 = vmatprep.subr.mxu0 0.0
  %1388 = vmatpush1.msra.mxu0 0.0
  %1389 = vmatprep.subr.mxu0 0.0
  %1390 = vmatpush1.msra.mxu0 0.0
  %1391 = vmatprep.subr.mxu0 0.0
  %1392 = vmatpush1.msra.mxu0 0.0
  %1393 = vmatprep.subr.mxu0 0.0
  %1394 = vmatpush1.msra.mxu0 0.0
  %1395 = vmatprep.subr.mxu0 0.0
  %1396 = vmatpush1.msra.mxu0 0.0
  %1397 = vmatprep.subr.mxu0 0.0
  %1398 = vmatpush1.msra.mxu0 0.0
  %1399 = vmatprep.subr.mxu0 0.0
  %1400 = vmatpush1.msra.mxu0 0.0
  %1401 = vmatprep.subr.mxu0 0.0
  %1402 = vmatpush1.msra.mxu0 0.0
  %1403 = vmatprep.subr.mxu0 0.0
  %1404 = vmatpush1.msra.mxu0 0.0
  %1405 = vmatprep.subr.mxu0 0.0
  %1406 = vmatpush1.msra.mxu0 0.0
  %1407 = vmatprep.subr.mxu0 0.0
  %1408 = vmatpush1.msra.mxu0 0.0
  %1409 = vmatprep.subr.mxu0 0.0
  %1410 = vmatpush1.msra.mxu0 0.0
  %1411 = vmatprep.subr.mxu0 0.0
  %1412 = vmatpush1.msra.mxu0 0.0
  %1413 = vmatprep.subr.mxu0 0.0
  %1414 = vmatpush1.msra.mxu0 0.0
  %1415 = vmatprep.mubr.f32.mxu0 0.0
  %1416 = vmatmul.mubr.f32.gmra.mrb[0].mxu0 %v1349
  %v1417 = vpop.f32.mrb[0].mxu0
  %v1418 = vadd.f32 %v1347, %v1417
  %v1419 = vpop.f32.mrb[0].mxu0
  %v1420 = vadd.f32 %v1348, %v1419
  %1421 = vdwg.mxu0
  %v1422 = vxor.u32 %v1418, 2147483648
  %v1423 = vmul.f32 %v1422, 1.442695
  %v1424 = vpow.pop %v1423
  %v1425 = vadd.f32 %v1424, 1.0
  %v1426 = vrcp.pop %v1425
  %v1427 = vmul.f32 1.0, %v1426
  %v1428 = vtanh.pop %v1420
  %v1429 = vxor.u32 %v1420, 2147483648
  %v1430 = vmul.f32 %v1429, 1.442695
  %v1431 = vpow.pop %v1430
  %v1432 = vadd.f32 %v1431, 1.0
  %v1433 = vrcp.pop %v1432
  %v1434 = vmul.f32 1.0, %v1433
  %v1435 = vmul.f32 %v1427, %v1338
  %v1436 = vmul.f32 %v1427, %v1428
  %1438 = vrot.lane.b32.xlu0 %v1436, 64
  %v1439 = vpop.permute.xlu0 %1438
  %v1441 = vadd.f32 %v1435, %v1439
  %v1442 = vtanh.pop %v1441
  %v1443 = vmul.f32 %v1434, %v1442
  %1445 = vrot.lane.b32.xlu0 %v1443, 64
  %v1446 = vpop.permute.xlu0 %1445
  %1448 = vst.msk [vmem:[#allocation3 + $0x30] sm:$0xff] %vm407, %v1446
  %s1449 = scalar_lea.vmem [#allocation2], 160
  %v1450 = vld [vmem:[%s1449] sm:$0xff]
  %v1451 = vld [vmem:[%s1449 + $0x8] sm:$0xff]
  %v1452 = vsel %vm407, %v1446, 0
  %1454 = vmatprep.subr.mxu0 %v386
  %1455 = vmatpush1.msra.mxu0 %v385
  %1456 = vmatprep.subr.mxu0 %v388
  %1457 = vmatpush1.msra.mxu0 %v387
  %1458 = vmatprep.subr.mxu0 %v390
  %1459 = vmatpush1.msra.mxu0 %v389
  %1460 = vmatprep.subr.mxu0 %v392
  %1461 = vmatpush1.msra.mxu0 %v391
  %1462 = vmatprep.subr.mxu0 %v394
  %1463 = vmatpush1.msra.mxu0 %v393
  %1464 = vmatprep.subr.mxu0 %v396
  %1465 = vmatpush1.msra.mxu0 %v395
  %1466 = vmatprep.subr.mxu0 %v398
  %1467 = vmatpush1.msra.mxu0 %v397
  %1468 = vmatprep.subr.mxu0 %v400
  %1469 = vmatpush1.msra.mxu0 %v399
  %1470 = vmatprep.subr.mxu0 0.0
  %1471 = vmatpush1.msra.mxu0 0.0
  %1472 = vmatprep.subr.mxu0 0.0
  %1473 = vmatpush1.msra.mxu0 0.0
  %1474 = vmatprep.subr.mxu0 0.0
  %1475 = vmatpush1.msra.mxu0 0.0
  %1476 = vmatprep.subr.mxu0 0.0
  %1477 = vmatpush1.msra.mxu0 0.0
  %1478 = vmatprep.subr.mxu0 0.0
  %1479 = vmatpush1.msra.mxu0 0.0
  %1480 = vmatprep.subr.mxu0 0.0
  %1481 = vmatpush1.msra.mxu0 0.0
  %1482 = vmatprep.subr.mxu0 0.0
  %1483 = vmatpush1.msra.mxu0 0.0
  %1484 = vmatprep.subr.mxu0 0.0
  %1485 = vmatpush1.msra.mxu0 0.0
  %1486 = vmatprep.subr.mxu0 0.0
  %1487 = vmatpush1.msra.mxu0 0.0
  %1488 = vmatprep.subr.mxu0 0.0
  %1489 = vmatpush1.msra.mxu0 0.0
  %1490 = vmatprep.subr.mxu0 0.0
  %1491 = vmatpush1.msra.mxu0 0.0
  %1492 = vmatprep.subr.mxu0 0.0
  %1493 = vmatpush1.msra.mxu0 0.0
  %1494 = vmatprep.subr.mxu0 0.0
  %1495 = vmatpush1.msra.mxu0 0.0
  %1496 = vmatprep.subr.mxu0 0.0
  %1497 = vmatpush1.msra.mxu0 0.0
  %1498 = vmatprep.subr.mxu0 0.0
  %1499 = vmatpush1.msra.mxu0 0.0
  %1500 = vmatprep.subr.mxu0 0.0
  %1501 = vmatpush1.msra.mxu0 0.0
  %1502 = vmatprep.subr.mxu0 0.0
  %1503 = vmatpush1.msra.mxu0 0.0
  %1504 = vmatprep.subr.mxu0 0.0
  %1505 = vmatpush1.msra.mxu0 0.0
  %1506 = vmatprep.subr.mxu0 0.0
  %1507 = vmatpush1.msra.mxu0 0.0
  %1508 = vmatprep.subr.mxu0 0.0
  %1509 = vmatpush1.msra.mxu0 0.0
  %1510 = vmatprep.subr.mxu0 0.0
  %1511 = vmatpush1.msra.mxu0 0.0
  %1512 = vmatprep.subr.mxu0 0.0
  %1513 = vmatpush1.msra.mxu0 0.0
  %1514 = vmatprep.subr.mxu0 0.0
  %1515 = vmatpush1.msra.mxu0 0.0
  %1516 = vmatprep.subr.mxu0 0.0
  %1517 = vmatpush1.msra.mxu0 0.0
  %1518 = vmatprep.mubr.f32.mxu0 0.0
  %1519 = vmatmul.mubr.f32.gmra.mrb[0].mxu0 %v1452
  %v1520 = vpop.f32.mrb[0].mxu0
  %v1521 = vadd.f32 %v1450, %v1520
  %v1522 = vpop.f32.mrb[0].mxu0
  %v1523 = vadd.f32 %v1451, %v1522
  %1524 = vdwg.mxu0
  %v1525 = vxor.u32 %v1521, 2147483648
  %v1526 = vmul.f32 %v1525, 1.442695
  %v1527 = vpow.pop %v1526
  %v1528 = vadd.f32 %v1527, 1.0
  %v1529 = vrcp.pop %v1528
  %v1530 = vmul.f32 1.0, %v1529
  %v1531 = vtanh.pop %v1523
  %v1532 = vxor.u32 %v1523, 2147483648
  %v1533 = vmul.f32 %v1532, 1.442695
  %v1534 = vpow.pop %v1533
  %v1535 = vadd.f32 %v1534, 1.0
  %v1536 = vrcp.pop %v1535
  %v1537 = vmul.f32 1.0, %v1536
  %v1538 = vmul.f32 %v1530, %v1441
  %v1539 = vmul.f32 %v1530, %v1531
  %1541 = vrot.lane.b32.xlu0 %v1539, 64
  %v1542 = vpop.permute.xlu0 %1541
  %v1544 = vadd.f32 %v1538, %v1542
  %v1545 = vtanh.pop %v1544
  %v1546 = vmul.f32 %v1537, %v1545
  %1548 = vrot.lane.b32.xlu0 %v1546, 64
  %v1549 = vpop.permute.xlu0 %1548
  %1551 = vst.msk [vmem:[#allocation3 + $0x38] sm:$0xff] %vm407, %v1549
  %s1552 = scalar_lea.vmem [#allocation2], 176
  %v1553 = vld [vmem:[%s1552] sm:$0xff]
  %v1554 = vld [vmem:[%s1552 + $0x8] sm:$0xff]
  %v1555 = vsel %vm407, %v1549, 0
  %1557 = vmatprep.subr.mxu0 %v386
  %1558 = vmatpush1.msra.mxu0 %v385
  %1559 = vmatprep.subr.mxu0 %v388
  %1560 = vmatpush1.msra.mxu0 %v387
  %1561 = vmatprep.subr.mxu0 %v390
  %1562 = vmatpush1.msra.mxu0 %v389
  %1563 = vmatprep.subr.mxu0 %v392
  %1564 = vmatpush1.msra.mxu0 %v391
  %1565 = vmatprep.subr.mxu0 %v394
  %1566 = vmatpush1.msra.mxu0 %v393
  %1567 = vmatprep.subr.mxu0 %v396
  %1568 = vmatpush1.msra.mxu0 %v395
  %1569 = vmatprep.subr.mxu0 %v398
  %1570 = vmatpush1.msra.mxu0 %v397
  %1571 = vmatprep.subr.mxu0 %v400
  %1572 = vmatpush1.msra.mxu0 %v399
  %1573 = vmatprep.subr.mxu0 0.0
  %1574 = vmatpush1.msra.mxu0 0.0
  %1575 = vmatprep.subr.mxu0 0.0
  %1576 = vmatpush1.msra.mxu0 0.0
  %1577 = vmatprep.subr.mxu0 0.0
  %1578 = vmatpush1.msra.mxu0 0.0
  %1579 = vmatprep.subr.mxu0 0.0
  %1580 = vmatpush1.msra.mxu0 0.0
  %1581 = vmatprep.subr.mxu0 0.0
  %1582 = vmatpush1.msra.mxu0 0.0
  %1583 = vmatprep.subr.mxu0 0.0
  %1584 = vmatpush1.msra.mxu0 0.0
  %1585 = vmatprep.subr.mxu0 0.0
  %1586 = vmatpush1.msra.mxu0 0.0
  %1587 = vmatprep.subr.mxu0 0.0
  %1588 = vmatpush1.msra.mxu0 0.0
  %1589 = vmatprep.subr.mxu0 0.0
  %1590 = vmatpush1.msra.mxu0 0.0
  %1591 = vmatprep.subr.mxu0 0.0
  %1592 = vmatpush1.msra.mxu0 0.0
  %1593 = vmatprep.subr.mxu0 0.0
  %1594 = vmatpush1.msra.mxu0 0.0
  %1595 = vmatprep.subr.mxu0 0.0
  %1596 = vmatpush1.msra.mxu0 0.0
  %1597 = vmatprep.subr.mxu0 0.0
  %1598 = vmatpush1.msra.mxu0 0.0
  %1599 = vmatprep.subr.mxu0 0.0
  %1600 = vmatpush1.msra.mxu0 0.0
  %1601 = vmatprep.subr.mxu0 0.0
  %1602 = vmatpush1.msra.mxu0 0.0
  %1603 = vmatprep.subr.mxu0 0.0
  %1604 = vmatpush1.msra.mxu0 0.0
  %1605 = vmatprep.subr.mxu0 0.0
  %1606 = vmatpush1.msra.mxu0 0.0
  %1607 = vmatprep.subr.mxu0 0.0
  %1608 = vmatpush1.msra.mxu0 0.0
  %1609 = vmatprep.subr.mxu0 0.0
  %1610 = vmatpush1.msra.mxu0 0.0
  %1611 = vmatprep.subr.mxu0 0.0
  %1612 = vmatpush1.msra.mxu0 0.0
  %1613 = vmatprep.subr.mxu0 0.0
  %1614 = vmatpush1.msra.mxu0 0.0
  %1615 = vmatprep.subr.mxu0 0.0
  %1616 = vmatpush1.msra.mxu0 0.0
  %1617 = vmatprep.subr.mxu0 0.0
  %1618 = vmatpush1.msra.mxu0 0.0
  %1619 = vmatprep.subr.mxu0 0.0
  %1620 = vmatpush1.msra.mxu0 0.0
  %1621 = vmatprep.mubr.f32.mxu0 0.0
  %1622 = vmatmul.mubr.f32.gmra.mrb[0].mxu0 %v1555
  %v1623 = vpop.f32.mrb[0].mxu0
  %v1624 = vadd.f32 %v1553, %v1623
  %v1625 = vpop.f32.mrb[0].mxu0
  %v1626 = vadd.f32 %v1554, %v1625
  %1627 = vdwg.mxu0
  %v1628 = vxor.u32 %v1624, 2147483648
  %v1629 = vmul.f32 %v1628, 1.442695
  %v1630 = vpow.pop %v1629
  %v1631 = vadd.f32 %v1630, 1.0
  %v1632 = vrcp.pop %v1631
  %v1633 = vmul.f32 1.0, %v1632
  %v1634 = vtanh.pop %v1626
  %v1635 = vxor.u32 %v1626, 2147483648
  %v1636 = vmul.f32 %v1635, 1.442695
  %v1637 = vpow.pop %v1636
  %v1638 = vadd.f32 %v1637, 1.0
  %v1639 = vrcp.pop %v1638
  %v1640 = vmul.f32 1.0, %v1639
  %v1641 = vmul.f32 %v1633, %v1544
  %v1642 = vmul.f32 %v1633, %v1634
  %1644 = vrot.lane.b32.xlu0 %v1642, 64
  %v1645 = vpop.permute.xlu0 %1644
  %v1647 = vadd.f32 %v1641, %v1645
  %v1648 = vtanh.pop %v1647
  %v1649 = vmul.f32 %v1640, %v1648
  %1651 = vrot.lane.b32.xlu0 %v1649, 64
  %v1652 = vpop.permute.xlu0 %1651
  %1654 = vst.msk [vmem:[#allocation3 + $0x40] sm:$0xff] %vm407, %v1652
  %v1655 = vld [vmem:[%s1552] sm:$0xff]
  %v1656 = vld [vmem:[%s1552 + $0x8] sm:$0xff]
  %v1657 = vsel %vm407, %v1652, 0
  %1659 = vmatprep.subr.mxu0 %v386
  %1660 = vmatpush1.msra.mxu0 %v385
  %1661 = vmatprep.subr.mxu0 %v388
  %1662 = vmatpush1.msra.mxu0 %v387
  %1663 = vmatprep.subr.mxu0 %v390
  %1664 = vmatpush1.msra.mxu0 %v389
  %1665 = vmatprep.subr.mxu0 %v392
  %1666 = vmatpush1.msra.mxu0 %v391
  %1667 = vmatprep.subr.mxu0 %v394
  %1668 = vmatpush1.msra.mxu0 %v393
  %1669 = vmatprep.subr.mxu0 %v396
  %1670 = vmatpush1.msra.mxu0 %v395
  %1671 = vmatprep.subr.mxu0 %v398
  %1672 = vmatpush1.msra.mxu0 %v397
  %1673 = vmatprep.subr.mxu0 %v400
  %1674 = vmatpush1.msra.mxu0 %v399
  %1675 = vmatprep.subr.mxu0 0.0
  %1676 = vmatpush1.msra.mxu0 0.0
  %1677 = vmatprep.subr.mxu0 0.0
  %1678 = vmatpush1.msra.mxu0 0.0
  %1679 = vmatprep.subr.mxu0 0.0
  %1680 = vmatpush1.msra.mxu0 0.0
  %1681 = vmatprep.subr.mxu0 0.0
  %1682 = vmatpush1.msra.mxu0 0.0
  %1683 = vmatprep.subr.mxu0 0.0
  %1684 = vmatpush1.msra.mxu0 0.0
  %1685 = vmatprep.subr.mxu0 0.0
  %1686 = vmatpush1.msra.mxu0 0.0
  %1687 = vmatprep.subr.mxu0 0.0
  %1688 = vmatpush1.msra.mxu0 0.0
  %1689 = vmatprep.subr.mxu0 0.0
  %1690 = vmatpush1.msra.mxu0 0.0
  %1691 = vmatprep.subr.mxu0 0.0
  %1692 = vmatpush1.msra.mxu0 0.0
  %1693 = vmatprep.subr.mxu0 0.0
  %1694 = vmatpush1.msra.mxu0 0.0
  %1695 = vmatprep.subr.mxu0 0.0
  %1696 = vmatpush1.msra.mxu0 0.0
  %1697 = vmatprep.subr.mxu0 0.0
  %1698 = vmatpush1.msra.mxu0 0.0
  %1699 = vmatprep.subr.mxu0 0.0
  %1700 = vmatpush1.msra.mxu0 0.0
  %1701 = vmatprep.subr.mxu0 0.0
  %1702 = vmatpush1.msra.mxu0 0.0
  %1703 = vmatprep.subr.mxu0 0.0
  %1704 = vmatpush1.msra.mxu0 0.0
  %1705 = vmatprep.subr.mxu0 0.0
  %1706 = vmatpush1.msra.mxu0 0.0
  %1707 = vmatprep.subr.mxu0 0.0
  %1708 = vmatpush1.msra.mxu0 0.0
  %1709 = vmatprep.subr.mxu0 0.0
  %1710 = vmatpush1.msra.mxu0 0.0
  %1711 = vmatprep.subr.mxu0 0.0
  %1712 = vmatpush1.msra.mxu0 0.0
  %1713 = vmatprep.subr.mxu0 0.0
  %1714 = vmatpush1.msra.mxu0 0.0
  %1715 = vmatprep.subr.mxu0 0.0
  %1716 = vmatpush1.msra.mxu0 0.0
  %1717 = vmatprep.subr.mxu0 0.0
  %1718 = vmatpush1.msra.mxu0 0.0
  %1719 = vmatprep.subr.mxu0 0.0
  %1720 = vmatpush1.msra.mxu0 0.0
  %1721 = vmatprep.subr.mxu0 0.0
  %1722 = vmatpush1.msra.mxu0 0.0
  %1723 = vmatprep.mubr.f32.mxu0 0.0
  %1724 = vmatmul.mubr.f32.gmra.mrb[0].mxu0 %v1657
  %v1725 = vpop.f32.mrb[0].mxu0
  %v1726 = vadd.f32 %v1655, %v1725
  %v1727 = vpop.f32.mrb[0].mxu0
  %v1728 = vadd.f32 %v1656, %v1727
  %1729 = vdwg.mxu0
  %v1730 = vxor.u32 %v1726, 2147483648
  %v1731 = vmul.f32 %v1730, 1.442695
  %v1732 = vpow.pop %v1731
  %v1733 = vadd.f32 %v1732, 1.0
  %v1734 = vrcp.pop %v1733
  %v1735 = vmul.f32 1.0, %v1734
  %v1736 = vtanh.pop %v1728
  %v1737 = vxor.u32 %v1728, 2147483648
  %v1738 = vmul.f32 %v1737, 1.442695
  %v1739 = vpow.pop %v1738
  %v1740 = vadd.f32 %v1739, 1.0
  %v1741 = vrcp.pop %v1740
  %v1742 = vmul.f32 1.0, %v1741
  %v1743 = vmul.f32 %v1735, %v1647
  %v1744 = vmul.f32 %v1735, %v1736
  %1746 = vrot.lane.b32.xlu0 %v1744, 64
  %v1747 = vpop.permute.xlu0 %1746
  %v1749 = vadd.f32 %v1743, %v1747
  %v1750 = vtanh.pop %v1749
  %v1751 = vmul.f32 %v1742, %v1750
  %vm1752 = vcmp.ge.s32.totalorder %v404, 32
  %vm1753 = vcmp.lt.s32.totalorder %v404, 64
  %vm1754 = vmand %vm1752, %vm1753
  %1756 = vrot.lane.b32.xlu0 %v1751, 64
  %v1757 = vpop.permute.xlu0 %1756
  %v1759 = vsel %vm1754, %v1757, %v1652
  %1760 = vst.msk [vmem:[#allocation3 + $0x48] sm:$0xff] %vm407, %v1759
  %v1761 = vld [vmem:[#allocation3] sm:$0xff]
  %v1762 = vld [vmem:[#allocation3 + $0x8] sm:$0xff]
  %v1763 = vld [vmem:[#allocation3 + $0x10] sm:$0xff]
  %v1764 = vld [vmem:[#allocation3 + $0x18] sm:$0xff]
  %v1765 = vld [vmem:[#allocation3 + $0x20] sm:$0xff]
  %v1766 = vld [vmem:[#allocation3 + $0x28] sm:$0xff]
  %v1767 = vld [vmem:[#allocation3 + $0x30] sm:$0xff]
  %v1768 = vld [vmem:[#allocation3 + $0x38] sm:$0xff]
  %v1769 = vld [vmem:[#allocation3 + $0x40] sm:$0xff]
  %v1770 = vld [vmem:[#allocation3 + $0x48] sm:$0xff]
  %v1771 = vld [vmem:[%s7] sm:$0xff]
  %v1772 = vld [vmem:[%s7 + $0x8] sm:$0xff]
  %v1773 = vld [vmem:[%s7 + $0x10] sm:$0xff]
  %v1774 = vld [vmem:[%s7 + $0x18] sm:$0xff]
  %v1775 = vld [vmem:[%s7 + $0x20] sm:$0xff]
  %v1776 = vld [vmem:[%s7 + $0x28] sm:$0xff]
  %v1777 = vld [vmem:[%s7 + $0x30] sm:$0xff]
  %v1778 = vld [vmem:[%s7 + $0x38] sm:$0xff]
  %v1779 = vld [vmem:[%s8] sm:$0x1]
  %v1781 = vlaneseq
  %v1782 = vshrl.u32 %v1781, 7
  %v1783 = vsub.s32 0, %v1782
  %v1784 = vrot.slane %v1779, %v1783
  %v1787 = vsel %vm407, %v1761, 0
  %v1790 = vsel %vm407, %v1762, 0
  %v1793 = vsel %vm407, %v1763, 0
  %v1796 = vsel %vm407, %v1764, 0
  %v1799 = vsel %vm407, %v1765, 0
  %v1802 = vsel %vm407, %v1766, 0
  %v1805 = vsel %vm407, %v1767, 0
  %v1808 = vsel %vm407, %v1768, 0
  %v1811 = vsel %vm407, %v1769, 0
  %v1814 = vsel %vm407, %v1770, 0
  %1816 = vmatprep.subr.mxu0 0.0
  %1817 = vmatpush1.msra.mxu0 %v1771
  %1818 = vmatprep.subr.mxu0 0.0
  %1819 = vmatpush1.msra.mxu0 %v1772
  %1820 = vmatprep.subr.mxu0 0.0
  %1821 = vmatpush1.msra.mxu0 %v1773
  %1822 = vmatprep.subr.mxu0 0.0
  %1823 = vmatpush1.msra.mxu0 %v1774
  %1824 = vmatprep.subr.mxu0 0.0
  %1825 = vmatpush1.msra.mxu0 %v1775
  %1826 = vmatprep.subr.mxu0 0.0
  %1827 = vmatpush1.msra.mxu0 %v1776
  %1828 = vmatprep.subr.mxu0 0.0
  %1829 = vmatpush1.msra.mxu0 %v1777
  %1830 = vmatprep.subr.mxu0 0.0
  %1831 = vmatpush1.msra.mxu0 %v1778
  %1832 = vmatprep.subr.mxu0 0.0
  %1833 = vmatpush1.msra.mxu0 0.0
  %1834 = vmatprep.subr.mxu0 0.0
  %1835 = vmatpush1.msra.mxu0 0.0
  %1836 = vmatprep.subr.mxu0 0.0
  %1837 = vmatpush1.msra.mxu0 0.0
  %1838 = vmatprep.subr.mxu0 0.0
  %1839 = vmatpush1.msra.mxu0 0.0
  %1840 = vmatprep.subr.mxu0 0.0
  %1841 = vmatpush1.msra.mxu0 0.0
  %1842 = vmatprep.subr.mxu0 0.0
  %1843 = vmatpush1.msra.mxu0 0.0
  %1844 = vmatprep.subr.mxu0 0.0
  %1845 = vmatpush1.msra.mxu0 0.0
  %1846 = vmatprep.subr.mxu0 0.0
  %1847 = vmatpush1.msra.mxu0 0.0
  %1848 = vmatprep.subr.mxu0 0.0
  %1849 = vmatpush1.msra.mxu0 0.0
  %1850 = vmatprep.subr.mxu0 0.0
  %1851 = vmatpush1.msra.mxu0 0.0
  %1852 = vmatprep.subr.mxu0 0.0
  %1853 = vmatpush1.msra.mxu0 0.0
  %1854 = vmatprep.subr.mxu0 0.0
  %1855 = vmatpush1.msra.mxu0 0.0
  %1856 = vmatprep.subr.mxu0 0.0
  %1857 = vmatpush1.msra.mxu0 0.0
  %1858 = vmatprep.subr.mxu0 0.0
  %1859 = vmatpush1.msra.mxu0 0.0
  %1860 = vmatprep.subr.mxu0 0.0
  %1861 = vmatpush1.msra.mxu0 0.0
  %1862 = vmatprep.subr.mxu0 0.0
  %1863 = vmatpush1.msra.mxu0 0.0
  %1864 = vmatprep.subr.mxu0 0.0
  %1865 = vmatpush1.msra.mxu0 0.0
  %1866 = vmatprep.subr.mxu0 0.0
  %1867 = vmatpush1.msra.mxu0 0.0
  %1868 = vmatprep.subr.mxu0 0.0
  %1869 = vmatpush1.msra.mxu0 0.0
  %1870 = vmatprep.subr.mxu0 0.0
  %1871 = vmatpush1.msra.mxu0 0.0
  %1872 = vmatprep.subr.mxu0 0.0
  %1873 = vmatpush1.msra.mxu0 0.0
  %1874 = vmatprep.subr.mxu0 0.0
  %1875 = vmatpush1.msra.mxu0 0.0
  %1876 = vmatprep.subr.mxu0 0.0
  %1877 = vmatpush1.msra.mxu0 0.0
  %1878 = vmatprep.subr.mxu0 0.0
  %1879 = vmatpush1.msra.mxu0 0.0
  %1880 = vmatprep.mubr.f32.mxu0 0.0
  %1881 = vmatmul.mubr.f32.gmra.mrb[0].mxu0 %v1787
  %v1882 = vpop.f32.mrb[0].mxu0
  %v1883 = vadd.f32 %v1784, %v1882
  %v1884 = vpop.f32.mrb[0].mxu0
  %1885 = vmatprep.mubr.f32.mxu0 0.0
  %1886 = vmatmul.mubr.f32.gmra.mrb[0].mxu0 %v1790
  %v1887 = vpop.f32.mrb[0].mxu0
  %v1888 = vadd.f32 %v1784, %v1887
  %v1889 = vpop.f32.mrb[0].mxu0
  %1890 = vmatprep.mubr.f32.mxu0 0.0
  %1891 = vmatmul.mubr.f32.gmra.mrb[0].mxu0 %v1793
  %v1892 = vpop.f32.mrb[0].mxu0
  %v1893 = vadd.f32 %v1784, %v1892
  %v1894 = vpop.f32.mrb[0].mxu0
  %1895 = vmatprep.mubr.f32.mxu0 0.0
  %1896 = vmatmul.mubr.f32.gmra.mrb[0].mxu0 %v1796
  %v1897 = vpop.f32.mrb[0].mxu0
  %v1898 = vadd.f32 %v1784, %v1897
  %v1899 = vpop.f32.mrb[0].mxu0
  %1900 = vmatprep.mubr.f32.mxu0 0.0
  %1901 = vmatmul.mubr.f32.gmra.mrb[0].mxu0 %v1799
  %v1902 = vpop.f32.mrb[0].mxu0
  %v1903 = vadd.f32 %v1784, %v1902
  %v1904 = vpop.f32.mrb[0].mxu0
  %1905 = vmatprep.mubr.f32.mxu0 0.0
  %1906 = vmatmul.mubr.f32.gmra.mrb[0].mxu0 %v1802
  %v1907 = vpop.f32.mrb[0].mxu0
  %v1908 = vadd.f32 %v1784, %v1907
  %v1909 = vpop.f32.mrb[0].mxu0
  %1910 = vmatprep.mubr.f32.mxu0 0.0
  %1911 = vmatmul.mubr.f32.gmra.mrb[0].mxu0 %v1805
  %v1912 = vpop.f32.mrb[0].mxu0
  %v1913 = vadd.f32 %v1784, %v1912
  %v1914 = vpop.f32.mrb[0].mxu0
  %1915 = vmatprep.mubr.f32.mxu0 0.0
  %1916 = vmatmul.mubr.f32.gmra.mrb[0].mxu0 %v1808
  %v1917 = vpop.f32.mrb[0].mxu0
  %v1918 = vadd.f32 %v1784, %v1917
  %v1919 = vpop.f32.mrb[0].mxu0
  %1920 = vmatprep.mubr.f32.mxu0 0.0
  %1921 = vmatmul.mubr.f32.gmra.mrb[0].mxu0 %v1811
  %v1922 = vpop.f32.mrb[0].mxu0
  %v1923 = vadd.f32 %v1784, %v1922
  %v1924 = vpop.f32.mrb[0].mxu0
  %1925 = vmatprep.mubr.f32.mxu0 0.0
  %1926 = vmatmul.mubr.f32.gmra.mrb[0].mxu0 %v1814
  %v1927 = vpop.f32.mrb[0].mxu0
  %v1928 = vadd.f32 %v1784, %v1927
  %v1929 = vpop.f32.mrb[0].mxu0
  %1930 = vdwg.mxu0
  %v1931 = vmax.f32 %v1883, 0.0
  %v1932 = vmax.f32 %v1888, 0.0
  %v1933 = vmax.f32 %v1893, 0.0
  %v1934 = vmax.f32 %v1898, 0.0
  %v1935 = vmax.f32 %v1903, 0.0
  %v1936 = vmax.f32 %v1908, 0.0
  %v1937 = vmax.f32 %v1913, 0.0
  %v1938 = vmax.f32 %v1918, 0.0
  %v1939 = vmax.f32 %v1923, 0.0
  %v1940 = vmax.f32 %v1928, 0.0
  %v1941 = vsel %vm163, %v1931, 0.0
  %v1942 = vsel %vm163, %v1932, 0.0
  %v1943 = vadd.f32 %v1941, %v1942
  %v1944 = vsel %vm163, %v1933, 0.0
  %v1945 = vadd.f32 %v1943, %v1944
  %v1946 = vsel %vm163, %v1934, 0.0
  %v1947 = vadd.f32 %v1945, %v1946
  %v1948 = vsel %vm163, %v1935, 0.0
  %v1949 = vadd.f32 %v1947, %v1948
  %v1950 = vsel %vm163, %v1936, 0.0
  %v1951 = vadd.f32 %v1949, %v1950
  %v1952 = vsel %vm163, %v1937, 0.0
  %v1953 = vadd.f32 %v1951, %v1952
  %v1954 = vsel %vm163, %v1938, 0.0
  %v1955 = vadd.f32 %v1953, %v1954
  %v1956 = vsel %vm163, %v1939, 0.0
  %v1957 = vadd.f32 %v1955, %v1956
  %v1958 = vsel %vm163, %v1940, 0.0
  %v1959 = vadd.f32 %v1957, %v1958
  %v1960 = vld [vmem:[%s9] sm:$0xff]
  %v1961 = vld [vmem:[%s10] sm:$0x1]
  %v1963 = vlaneseq
  %v1964 = vshrl.u32 %v1963, 7
  %v1965 = vsub.s32 0, %v1964
  %v1966 = vrot.slane %v1961, %v1965
  %v1969 = vsel %vm163, %v1959, 0
  %1971 = vmatprep.subr.mxu0 0.0
  %1972 = vmatpush1.msra.mxu0 %v1960
  %1973 = vmatprep.subr.mxu0 0.0
  %1974 = vmatpush1.msra.mxu0 0.0
  %1975 = vmatprep.subr.mxu0 0.0
  %1976 = vmatpush1.msra.mxu0 0.0
  %1977 = vmatprep.subr.mxu0 0.0
  %1978 = vmatpush1.msra.mxu0 0.0
  %1979 = vmatprep.subr.mxu0 0.0
  %1980 = vmatpush1.msra.mxu0 0.0
  %1981 = vmatprep.subr.mxu0 0.0
  %1982 = vmatpush1.msra.mxu0 0.0
  %1983 = vmatprep.subr.mxu0 0.0
  %1984 = vmatpush1.msra.mxu0 0.0
  %1985 = vmatprep.subr.mxu0 0.0
  %1986 = vmatpush1.msra.mxu0 0.0
  %1987 = vmatprep.subr.mxu0 0.0
  %1988 = vmatpush1.msra.mxu0 0.0
  %1989 = vmatprep.subr.mxu0 0.0
  %1990 = vmatpush1.msra.mxu0 0.0
  %1991 = vmatprep.subr.mxu0 0.0
  %1992 = vmatpush1.msra.mxu0 0.0
  %1993 = vmatprep.subr.mxu0 0.0
  %1994 = vmatpush1.msra.mxu0 0.0
  %1995 = vmatprep.subr.mxu0 0.0
  %1996 = vmatpush1.msra.mxu0 0.0
  %1997 = vmatprep.subr.mxu0 0.0
  %1998 = vmatpush1.msra.mxu0 0.0
  %1999 = vmatprep.subr.mxu0 0.0
  %2000 = vmatpush1.msra.mxu0 0.0
  %2001 = vmatprep.subr.mxu0 0.0
  %2002 = vmatpush1.msra.mxu0 0.0
  %2003 = vmatprep.subr.mxu0 0.0
  %2004 = vmatpush1.msra.mxu0 0.0
  %2005 = vmatprep.subr.mxu0 0.0
  %2006 = vmatpush1.msra.mxu0 0.0
  %2007 = vmatprep.subr.mxu0 0.0
  %2008 = vmatpush1.msra.mxu0 0.0
  %2009 = vmatprep.subr.mxu0 0.0
  %2010 = vmatpush1.msra.mxu0 0.0
  %2011 = vmatprep.subr.mxu0 0.0
  %2012 = vmatpush1.msra.mxu0 0.0
  %2013 = vmatprep.subr.mxu0 0.0
  %2014 = vmatpush1.msra.mxu0 0.0
  %2015 = vmatprep.subr.mxu0 0.0
  %2016 = vmatpush1.msra.mxu0 0.0
  %2017 = vmatprep.subr.mxu0 0.0
  %2018 = vmatpush1.msra.mxu0 0.0
  %2019 = vmatprep.subr.mxu0 0.0
  %2020 = vmatpush1.msra.mxu0 0.0
  %2021 = vmatprep.subr.mxu0 0.0
  %2022 = vmatpush1.msra.mxu0 0.0
  %2023 = vmatprep.subr.mxu0 0.0
  %2024 = vmatpush1.msra.mxu0 0.0
  %2025 = vmatprep.subr.mxu0 0.0
  %2026 = vmatpush1.msra.mxu0 0.0
  %2027 = vmatprep.subr.mxu0 0.0
  %2028 = vmatpush1.msra.mxu0 0.0
  %2029 = vmatprep.subr.mxu0 0.0
  %2030 = vmatpush1.msra.mxu0 0.0
  %2031 = vmatprep.subr.mxu0 0.0
  %2032 = vmatpush1.msra.mxu0 0.0
  %2033 = vmatprep.subr.mxu0 0.0
  %2034 = vmatpush1.msra.mxu0 0.0
  %2035 = vmatprep.mubr.f32.mxu0 0.0
  %2036 = vmatmul.mubr.f32.gmra.mrb[0].mxu0 %v1969
  %v2037 = vpop.f32.mrb[0].mxu0
  %v2038 = vadd.f32 %v1966, %v2037
  %v2039 = vpop.f32.mrb[0].mxu0
  %2040 = vdwg.mxu0
  %vm2041 = vcmask 31744
  %v2042 = vsel %vm2041, %v2038, -inf
  %2043 = vmax.xlane.f32.xlu0 %v2042
  %v2044 = vpop.xlane.xlu0 %2043
  %v2045 = vsub.f32 %v2038, %v2044
  %v2046 = vmul.f32 %v2045, 1.442695
  %v2047 = vpow.pop %v2046
  %v2048 = vsel %vm2041, %v2047, 0.0
  %2049 = vadd.xlane.f32.xlu0 %v2048
  %v2050 = vpop.xlane.xlu0 %2049
  %v2051 = vrcp.pop %v2050
  %v2052 = vmul.f32 %v2047, %v2051
  %2053 = vst.msk [vmem:[%s11] sm:$0xff] %vm2041, %v2052
  // Predicated region
  $region46: #{decoder_forward.1} parent=0 // pred_check
    _
  $region47: #{decoder_forward.1} parent=0 // pred_check_branch
    %2055 = sbr.rel (0) target = $region49
  $region48: #{decoder_forward.1} parent=0 // pred_region
    _
  $region49: #{decoder_forward.1} parent=0 // pred_fallthru
    _
  // Predicated region
  $region50: #{decoder_forward.1} parent=0 // pred_check
    _
  $region51: #{decoder_forward.1} parent=0 // pred_check_branch
    %2057 = sbr.rel (0) target = $region53
  $region52: #{decoder_forward.1} parent=0 // pred_region
    _
  $region53: #{decoder_forward.1} parent=0 // pred_fallthru
    _

</llo_original>
